<compile_context>
chip_gen: v5e
topology: v5e:2x2
jax: 0.10.0
libtpu: 0.0.40
codegen_flags: <defaults>
</compile_context>

<pallas_src>
import functools

import jax
import jax.numpy as jnp
from jax.experimental import pallas as pl
from jax.experimental.pallas import tpu as pltpu

_BN_EPS = 1e-5


def _detect_vmem_limit():
    """96 MiB scoped limit on 128-MiB-VMEM chips (v5e/v6e), 32 MiB otherwise."""
    try:
        info = pltpu.get_tpu_info()
        cap = getattr(info, "vmem_capacity_bytes", None)
        if cap is not None and cap >= 128 * 1024 * 1024:
            return 96 * 1024 * 1024
    except Exception:
        pass
    return 32 * 1024 * 1024


_VMEM_LIMIT = _detect_vmem_limit()
_MM_BUDGET = int(_VMEM_LIMIT * 0.55)           # matmul tile footprint budget
_TM_CAP = 512 if _VMEM_LIMIT >= 64 * 1024 * 1024 else 256


# ------------------------------------------------------------------------ utilities
def _round_up(x, m):
    return ((x + m - 1) // m) * m


def _pad2d(x, rows, cols):
    pr, pc = rows - x.shape[0], cols - x.shape[1]
    if pr == 0 and pc == 0:
        return x
    return jnp.pad(x, ((0, pr), (0, pc)))


def _pad_rows(x, rows):
    pr = rows - x.shape[0]
    if pr == 0:
        return x
    return jnp.pad(x, ((0, pr),) + ((0, 0),) * (x.ndim - 1))


def _choose_rows(M, C, max_tm=1024):
    """Row tile for element-wise slabs: 16-aligned, capped so ~3 double-buffered
    bf16 streams stay well inside the VMEM limit."""
    cap = min(max_tm, max(16, (2 * 1024 * 1024) // max(C, 1)))
    cap = max(16, cap - cap % 16)
    if M <= cap:
        tm = _round_up(M, 16)
        return tm, tm
    return _round_up(M, cap), cap


def _mm_fits(tm, tk, tn, budget):
    a = 2 * tm * tk * 2            # A, bf16, double-buffered
    b = 2 * tk * tn * 2            # B, bf16, double-buffered
    y = 2 * tm * tn * 2            # out, bf16, double-buffered
    acc = tm * tn * 4              # f32 accumulator scratch
    sq = 4 * 2 * tn * 4            # partial-stat outputs (tiny)
    return a + b + y + acc + sq <= budget


def _mm_tiles(M, K, N):
    """Adaptive matmul tiles: lane-dense N, full-K whenever it fits VMEM."""
    # output channels
    if N < 64:
        Np, tn = 128, 128                      # lane-dense stores (FC, N=10)
    elif N < 128:
        Np, tn = N, N                          # full-dim block, no zero-pad
    else:
        Np = _round_up(N, 128)
        if Np % 512 == 0:
            tn = 512
        elif Np % 256 == 0:
            tn = 256
        else:
            tn = 128
    # rows
    if M <= _TM_CAP:
        Mp = _round_up(M, 16)
        tm = Mp
    else:
        tm = _TM_CAP
        Mp = _round_up(M, tm)
    # contraction: prefer a single resident full-K tile
    if K <= 128:
        Kp, tk = K, K
    else:
        Kp = _round_up(K, 128)
        tk = 128
        for cand in (Kp, 2048, 1024, 512, 256):
            if Kp % cand == 0 and _mm_fits(tm, cand, tn, _MM_BUDGET):
                tk = cand
                break
    return Mp, tm, Kp, tk, Np, tn


# ----------------------------------------- matmul + fused per-block BN-stats epilogue
def _mm_stats_kernel(a_ref, b_ref, y_ref, s_ref, q_ref, acc_ref):
    k = pl.program_id(2)
    nk = pl.num_programs(2)

    @pl.when(k == 0)
    def _():
        acc_ref[...] = jnp.zeros_like(acc_ref)

    acc_ref[...] += jnp.dot(a_ref[...], b_ref[...],
                            preferred_element_type=jnp.float32)

    @pl.when(k == nk - 1)
    def _():
        y = acc_ref[...]
        y_ref[...] = y.astype(y_ref.dtype)
        # per-(M-block, N-block) partial sums; reduced over M blocks in glue,
        # so both M and N grid axes stay 'parallel'.
        s_ref[...] = jnp.sum(y, axis=0, keepdims=True).reshape(s_ref.shape)
        q_ref[...] = jnp.sum(y * y, axis=0, keepdims=True).reshape(q_ref.shape)


def matmul_stats(a, b, out_dtype=jnp.bfloat16):
    """(M,K)@(K,N), bf16 inputs, f32 accumulation.  Returns
    (y[M,N] in out_dtype, col_sum[N] f32, col_sumsq[N] f32)."""
    M, K = a.shape
    K2, N = b.shape
    assert K == K2
    Mp, tm, Kp, tk, Np, tn = _mm_tiles(M, K, N)
    ap = _pad2d(a.astype(jnp.bfloat16), Mp, Kp)
    bp = _pad2d(b.astype(jnp.bfloat16), Kp, Np)
    nmb = Mp // tm
    grid = (nmb, Np // tn, Kp // tk)
    y, s, q = pl.pallas_call(
        _mm_stats_kernel,
        out_shape=(jax.ShapeDtypeStruct((Mp, Np), out_dtype),
                   jax.ShapeDtypeStruct((nmb, 1, Np), jnp.float32),
                   jax.ShapeDtypeStruct((nmb, 1, Np), jnp.float32)),
        grid_spec=pltpu.PrefetchScalarGridSpec(
            num_scalar_prefetch=0,
            grid=grid,
            in_specs=[pl.BlockSpec((tm, tk), lambda i, j, k: (i, k)),
                      pl.BlockSpec((tk, tn), lambda i, j, k: (k, j))],
            out_specs=(pl.BlockSpec((tm, tn), lambda i, j, k: (i, j)),
                       pl.BlockSpec((1, 1, tn), lambda i, j, k: (i, 0, j)),
                       pl.BlockSpec((1, 1, tn), lambda i, j, k: (i, 0, j))),
            scratch_shapes=[pltpu.VMEM((tm, tn), jnp.float32)]),
        compiler_params=pltpu.CompilerParams(
            dimension_semantics=("parallel", "parallel", "arbitrary"),
            vmem_limit_bytes=_VMEM_LIMIT),
    )(ap, bp)
    if Mp != M or Np != N:
        y = y[:M, :N]
    s_tot = jnp.sum(s[:, 0, :N], axis=0)
    q_tot = jnp.sum(q[:, 0, :N], axis=0)
    return y, s_tot, q_tot


# --------------------------------------------------------- matmul + fused bias (FC)
def _mm_bias_kernel(a_ref, b_ref, bias_ref, o_ref, acc_ref):
    k = pl.program_id(2)

    @pl.when(k == 0)
    def _():
        acc_ref[...] = jnp.zeros_like(acc_ref)

    acc_ref[...] += jnp.dot(a_ref[...], b_ref[...],
                            preferred_element_type=jnp.float32)

    @pl.when(k == pl.num_programs(2) - 1)
    def _():
        o_ref[...] = (acc_ref[...] + bias_ref[...]).astype(o_ref.dtype)


def matmul_bias(a, b, bias, out_dtype=jnp.float32):
    M, K = a.shape
    K2, N = b.shape
    assert K == K2
    Mp, tm, Kp, tk, Np, tn = _mm_tiles(M, K, N)
    ap = _pad2d(a.astype(jnp.bfloat16), Mp, Kp)
    bp = _pad2d(b.astype(jnp.bfloat16), Kp, Np)
    biasp = _pad2d(bias.reshape(1, N).astype(jnp.float32), 1, Np)
    grid = (Mp // tm, Np // tn, Kp // tk)
    out = pl.pallas_call(
        _mm_bias_kernel,
        out_shape=jax.ShapeDtypeStruct((Mp, Np), out_dtype),
        grid_spec=pltpu.PrefetchScalarGridSpec(
            num_scalar_prefetch=0,
            grid=grid,
            in_specs=[pl.BlockSpec((tm, tk), lambda i, j, k: (i, k)),
                      pl.BlockSpec((tk, tn), lambda i, j, k: (k, j)),
                      pl.BlockSpec((1, tn), lambda i, j, k: (0, j))],
            out_specs=pl.BlockSpec((tm, tn), lambda i, j, k: (i, j)),
            scratch_shapes=[pltpu.VMEM((tm, tn), jnp.float32)]),
        compiler_params=pltpu.CompilerParams(
            dimension_semantics=("parallel", "parallel", "arbitrary"),
            vmem_limit_bytes=_VMEM_LIMIT),
    )(ap, bp, biasp)
    return out[:M, :N]


# --------------------------------------- fused scale*x + bias (+residual) (+ReLU)
def _affine_kernel(x_ref, s_ref, b_ref, o_ref, *, relu):
    y = x_ref[...].astype(jnp.float32) * s_ref[...] + b_ref[...]
    if relu:
        y = jnp.maximum(y, 0.0)
    o_ref[...] = y.astype(o_ref.dtype)


def _affine_res_kernel(x_ref, s_ref, b_ref, r_ref, o_ref, *, relu):
    y = (x_ref[...].astype(jnp.float32) * s_ref[...] + b_ref[...]
         + r_ref[...].astype(jnp.float32))
    if relu:
        y = jnp.maximum(y, 0.0)
    o_ref[...] = y.astype(o_ref.dtype)


def affine_act(x, scale, bias, residual=None, relu=True):
    """Element-wise y = x*scale + bias (+res) (+ReLU) on an (M, C) slab; bf16 I/O."""
    M, C = x.shape
    Mp, tm = _choose_rows(M, C)
    xp = _pad_rows(x, Mp)
    sp = scale.reshape(1, C).astype(jnp.float32)
    bp = bias.reshape(1, C).astype(jnp.float32)
    x_spec = pl.BlockSpec((tm, C), lambda i: (i, 0))
    v_spec = pl.BlockSpec((1, C), lambda i: (0, 0))
    if residual is None:
        kernel = functools.partial(_affine_kernel, relu=relu)
        in_specs = [x_spec, v_spec, v_spec]
        args = (xp, sp, bp)
    else:
        rp = _pad_rows(residual, Mp)
        kernel = functools.partial(_affine_res_kernel, relu=relu)
        in_specs = [x_spec, v_spec, v_spec, x_spec]
        args = (xp, sp, bp, rp)
    out = pl.pallas_call(
        kernel,
        out_shape=jax.ShapeDtypeStruct((Mp, C), jnp.bfloat16),
        grid_spec=pltpu.PrefetchScalarGridSpec(
            num_scalar_prefetch=0,
            grid=(Mp // tm,),
            in_specs=in_specs,
            out_specs=x_spec),
        compiler_params=pltpu.CompilerParams(
            dimension_semantics=("parallel",),
            vmem_limit_bytes=_VMEM_LIMIT),
    )(*args)
    return out[:M]


# ------------------------------------------------------------------------ max pooling
def _maxpool_kernel(ee_ref, eo_ref, oe_ref, oo_ref, o_ref):
    ho, wo = o_ref.shape[1], o_ref.shape[2]
    # 3x3/stride-2 window taps: padded-row index 2*ho+di, column 2*wo+dj, so each
    # tap is a contiguous offset slice of one of the four parity planes.
    m = ee_ref[0, 0:ho, 0:wo, :]
    m = jnp.maximum(m, eo_ref[0, 0:ho, 0:wo, :])
    m = jnp.maximum(m, ee_ref[0, 0:ho, 1:wo + 1, :])
    m = jnp.maximum(m, oe_ref[0, 0:ho, 0:wo, :])
    m = jnp.maximum(m, oo_ref[0, 0:ho, 0:wo, :])
    m = jnp.maximum(m, oe_ref[0, 0:ho, 1:wo + 1, :])
    m = jnp.maximum(m, ee_ref[0, 1:ho + 1, 0:wo, :])
    m = jnp.maximum(m, eo_ref[0, 1:ho + 1, 0:wo, :])
    m = jnp.maximum(m, ee_ref[0, 1:ho + 1, 1:wo + 1, :])
    o_ref[0] = m


def maxpool2d(x, k=3, stride=2, pad=1):
    """nn.MaxPool2d(3, 2, 1) on NHWC bf16 without a k*k-expanded patch slab."""
    assert k == 3 and stride == 2 and pad == 1
    N, H, W, C = x.shape
    Ho = (H + 2 * pad - k) // stride + 1
    Wo = (W + 2 * pad - k) // stride + 1
    xp = jnp.pad(x, ((0, 0), (pad, pad), (pad, pad), (0, 0)),
                 constant_values=-jnp.inf)

    def parity(hp, wp):
        s = xp[:, hp::2, wp::2, :]
        ph, pw = Ho + 1 - s.shape[1], Wo + 1 - s.shape[2]
        if ph or pw:
            s = jnp.pad(s, ((0, 0), (0, ph), (0, pw), (0, 0)),
                        constant_values=-jnp.inf)
        return s

    ee, eo, oe, oo = parity(0, 0), parity(0, 1), parity(1, 0), parity(1, 1)
    in_spec = pl.BlockSpec((1, Ho + 1, Wo + 1, C), lambda n: (n, 0, 0, 0))
    out = pl.pallas_call(
        _maxpool_kernel,
        out_shape=jax.ShapeDtypeStruct((N, Ho, Wo, C), x.dtype),
        grid_spec=pltpu.PrefetchScalarGridSpec(
            num_scalar_prefetch=0,
            grid=(N,),
            in_specs=[in_spec, in_spec, in_spec, in_spec],
            out_specs=pl.BlockSpec((1, Ho, Wo, C), lambda n: (n, 0, 0, 0))),
        compiler_params=pltpu.CompilerParams(
            dimension_semantics=("parallel",),
            vmem_limit_bytes=_VMEM_LIMIT),
    )(ee, eo, oe, oo)
    return out


# --------------------------------------------------------------- adaptive avg pool 1x1
def _avgpool_kernel(x_ref, o_ref):
    o_ref[...] = jnp.mean(x_ref[...].astype(jnp.float32), axis=1)


def adaptive_avgpool_1x1(x):
    N, H, W, C = x.shape
    HW = H * W
    xr = x.reshape(N, HW, C)
    bn = N if N <= 64 else 64
    Nr = _round_up(N, bn)
    xr = _pad_rows(xr, Nr)
    out = pl.pallas_call(
        _avgpool_kernel,
        out_shape=jax.ShapeDtypeStruct((Nr, C), jnp.float32),
        grid_spec=pltpu.PrefetchScalarGridSpec(
            num_scalar_prefetch=0,
            grid=(Nr // bn,),
            in_specs=[pl.BlockSpec((bn, HW, C), lambda i: (i, 0, 0))],
            out_specs=pl.BlockSpec((bn, C), lambda i: (i, 0))),
        compiler_params=pltpu.CompilerParams(
            dimension_semantics=("parallel",),
            vmem_limit_bytes=_VMEM_LIMIT),
    )(xr)
    return out[:N]


# --------------------------------------------------------------- conv + BN (+res) + act
def _im2col(x, kh, kw, stride, pad):
    N, H, W, Cin = x.shape
    x = x.astype(jnp.bfloat16)
    if kh == 1 and kw == 1 and pad == 0:
        xs = x[:, ::stride, ::stride, :]
        Ho, Wo = xs.shape[1], xs.shape[2]
        return xs.reshape(N * Ho * Wo, Cin), Ho, Wo
    xp = jnp.pad(x, ((0, 0), (pad, pad), (pad, pad), (0, 0)))
    Ho = (H + 2 * pad - kh) // stride + 1
    Wo = (W + 2 * pad - kw) // stride + 1
    patches = [xp[:, i:i + stride * Ho:stride, j:j + stride * Wo:stride, :]
               for i in range(kh) for j in range(kw)]
    cols = jnp.stack(patches, axis=3).reshape(N * Ho * Wo, kh * kw * Cin)
    return cols, Ho, Wo


def conv_bn_act(x, w, gamma, beta, stride=1, pad=0, residual=None, relu=True):
    """conv2d (no bias) -> train-mode BatchNorm2d -> optional residual add -> ReLU.
    BN batch statistics come from per-block partial sums fused into the conv matmul."""
    N = x.shape[0]
    Cout, Cin, kh, kw = w.shape
    cols, Ho, Wo = _im2col(x, kh, kw, stride, pad)
    wm = jnp.transpose(w, (2, 3, 1, 0)).reshape(kh * kw * Cin, Cout)
    y, s, q = matmul_stats(cols, wm, out_dtype=jnp.bfloat16)
    M = N * Ho * Wo
    mean = s / M
    var = jnp.maximum(q / M - mean * mean, 0.0)   # biased batch variance, clamped
    scale = gamma * jax.lax.rsqrt(var + _BN_EPS)
    bias = beta - mean * scale
    res2 = residual.reshape(M, Cout) if residual is not None else None
    out = affine_act(y, scale, bias, residual=res2, relu=relu)
    return out.reshape(N, Ho, Wo, Cout)


# ----------------------------------------------------------------------- model params
def _init_conv(key, cout, cin, kh, kw):
    fan_in = cin * kh * kw
    return jax.random.normal(key, (cout, cin, kh, kw), jnp.float32) / jnp.sqrt(fan_in)


def _init_bn(key, c):
    k1, k2 = jax.random.split(key)
    return {"gamma": 1.0 + 0.1 * jax.random.normal(k1, (c,), jnp.float32),
            "beta": 0.1 * jax.random.normal(k2, (c,), jnp.float32)}


def init_resnet_params(key, layers, img_channel, num_classes):
    keys = iter(jax.random.split(key, 512))
    params = {
        "stem_conv": _init_conv(next(keys), 64, img_channel, 7, 7),
        "stem_bn": _init_bn(next(keys), 64),
    }
    in_ch = 64
    blocks = []
    for nb, mid, layer_stride in zip(layers, (64, 128, 256, 512), (1, 2, 2, 2)):
        for bi in range(nb):
            s = layer_stride if bi == 0 else 1
            blk = {
                "conv1": _init_conv(next(keys), mid, in_ch, 1, 1),
                "bn1": _init_bn(next(keys), mid),
                "conv2": _init_conv(next(keys), mid, mid, 3, 3),
                "bn2": _init_bn(next(keys), mid),
                "conv3": _init_conv(next(keys), mid * 4, mid, 1, 1),
                "bn3": _init_bn(next(keys), mid * 4),
                "stride": s,
            }
            if s != 1 or in_ch != mid * 4:
                blk["ds_conv"] = _init_conv(next(keys), mid * 4, in_ch, 1, 1)
                blk["ds_bn"] = _init_bn(next(keys), mid * 4)
            blocks.append(blk)
            in_ch = mid * 4
    params["blocks"] = blocks
    params["fc_w"] = jax.random.normal(next(keys), (num_classes, 512 * 4),
                                       jnp.float32) / jnp.sqrt(512 * 4)
    params["fc_b"] = 0.1 * jax.random.normal(next(keys), (num_classes,), jnp.float32)
    return params


# --------------------------------------------------------------------------- forward
def bottleneck_block(x, p):
    identity = x
    y = conv_bn_act(x, p["conv1"], p["bn1"]["gamma"], p["bn1"]["beta"],
                    stride=1, pad=0, relu=True)
    y = conv_bn_act(y, p["conv2"], p["bn2"]["gamma"], p["bn2"]["beta"],
                    stride=p["stride"], pad=1, relu=True)
    if "ds_conv" in p:
        identity = conv_bn_act(identity, p["ds_conv"], p["ds_bn"]["gamma"],
                               p["ds_bn"]["beta"], stride=p["stride"], pad=0,
                               relu=False)
    # bn3 + residual add + ReLU, fused in the affine epilogue kernel
    y = conv_bn_act(y, p["conv3"], p["bn3"]["gamma"], p["bn3"]["beta"],
                    stride=1, pad=0, residual=identity, relu=True)
    return y


def resnet_forward(params, x_nchw):
    # input arrives NCHW (PyTorch convention) -> NHWC bf16 for the kernels
    x = jnp.transpose(x_nchw, (0, 2, 3, 1)).astype(jnp.bfloat16)
    x = conv_bn_act(x, params["stem_conv"], params["stem_bn"]["gamma"],
                    params["stem_bn"]["beta"], stride=2, pad=3, relu=True)
    x = maxpool2d(x, k=3, stride=2, pad=1)
    for blk in params["blocks"]:
        x = bottleneck_block(x, blk)
    pooled = adaptive_avgpool_1x1(x)                           # (N, 2048) f32
    logits = matmul_bias(pooled.astype(jnp.bfloat16),
                         params["fc_w"].T.astype(jnp.bfloat16),
                         params["fc_b"])                       # fc bias fused
    return logits


if __name__ == "__main__":
    key = jax.random.PRNGKey(0)
    pkey, xkey = jax.random.split(key)

    layers = [1, 1, 1, 1]           # small bottleneck ResNet, same block structure
    img_channel, num_classes = 3, 10
    params = init_resnet_params(pkey, layers, img_channel, num_classes)

    x = jax.random.normal(xkey, (2, img_channel, 32, 32), jnp.float32)  # NCHW
    logits = resnet_forward(params, x)
    jax.block_until_ready(logits)
    assert logits.shape == (2, num_classes)
    assert bool(jnp.all(jnp.isfinite(logits)))
    print("KERNEL_OK")
</pallas_src>

<mosaic_0001>
module attributes {stable_mosaic.version = 11 : i64} {
  func.func @_mm_stats_kernel(%arg0: i32, %arg1: i32, %arg2: i32, %arg3: memref<256x256xbf16, #tpu.memory_space<vmem>>, %arg4: memref<256x64xbf16, #tpu.memory_space<vmem>>, %arg5: memref<256x64xbf16, #tpu.memory_space<vmem>>, %arg6: memref<1x1x64xf32, #tpu.memory_space<vmem>>, %arg7: memref<1x1x64xf32, #tpu.memory_space<vmem>>, %arg8: memref<256x64xf32, #tpu.memory_space<vmem>>) attributes {dimension_semantics = [#tpu.dimension_semantics<parallel>, #tpu.dimension_semantics<parallel>, #tpu.dimension_semantics<arbitrary>], iteration_bounds = array<i64: 2, 1, 1>, scalar_prefetch = 0 : i64, scratch_operands = 1 : i64, tpu.core_type = #tpu.core_type<tc>, window_params = [{transform_indices = @transform_0, window_bounds = array<i64: 256, 256>}, {transform_indices = @transform_1, window_bounds = array<i64: 256, 64>}, {transform_indices = @transform_2, window_bounds = array<i64: 256, 64>}, {transform_indices = @transform_3, window_bounds = array<i64: 1, 1, 64>}, {transform_indices = @transform_4, window_bounds = array<i64: 1, 1, 64>}]} {
    %c0_i32 = arith.constant 0 : i32
    %0 = arith.cmpi eq, %arg2, %c0_i32 : i32
    %1 = arith.extui %0 : i1 to i32
    %c0_i32_0 = arith.constant 0 : i32
    %2 = arith.cmpi ne, %1, %c0_i32_0 : i32
    scf.if %2 {
      %cst_10 = arith.constant 0.000000e+00 : f32
      %12 = vector.broadcast %cst_10 : f32 to vector<256x64xf32>
      %c0_11 = arith.constant 0 : index
      %c0_12 = arith.constant 0 : index
      %13 = vector.load %arg8[%c0_11, %c0_12] : memref<256x64xf32, #tpu.memory_space<vmem>>, vector<256x64xf32>
      tpu.vector_store %arg8[%c0_11, %c0_12], %12 {strides = array<i32>} : memref<256x64xf32, #tpu.memory_space<vmem>>, vector<256x64xf32>,
    } else {
    }
    %c0 = arith.constant 0 : index
    %c0_1 = arith.constant 0 : index
    %3 = vector.load %arg8[%c0, %c0_1] : memref<256x64xf32, #tpu.memory_space<vmem>>, vector<256x64xf32>
    %c0_2 = arith.constant 0 : index
    %c0_3 = arith.constant 0 : index
    %4 = vector.load %arg3[%c0_2, %c0_3] : memref<256x256xbf16, #tpu.memory_space<vmem>>, vector<256x256xbf16>
    %c0_4 = arith.constant 0 : index
    %c0_5 = arith.constant 0 : index
    %5 = vector.load %arg4[%c0_4, %c0_5] : memref<256x64xbf16, #tpu.memory_space<vmem>>, vector<256x64xbf16>
    %cst = arith.constant dense<0.000000e+00> : vector<256x64xf32>
    %6 = tpu.matmul %4, %5, %cst {dimension_numbers = #tpu.dot_dimension_numbers<[1], [0], [0], [1], [0, 0, 1, 1], [], []>} : vector<256x256xbf16>, vector<256x64xbf16>, vector<256x64xf32> -> vector<256x64xf32>
    %7 = arith.addf %3, %6 : vector<256x64xf32>
    %c0_6 = arith.constant 0 : index
    %c0_7 = arith.constant 0 : index
    %8 = vector.load %arg8[%c0_6, %c0_7] : memref<256x64xf32, #tpu.memory_space<vmem>>, vector<256x64xf32>
    tpu.vector_store %arg8[%c0_6, %c0_7], %7 {strides = array<i32>} : memref<256x64xf32, #tpu.memory_space<vmem>>, vector<256x64xf32>,
    %c0_i32_8 = arith.constant 0 : i32
    %9 = arith.cmpi eq, %arg2, %c0_i32_8 : i32
    %10 = arith.extui %9 : i1 to i32
    %c0_i32_9 = arith.constant 0 : i32
    %11 = arith.cmpi ne, %10, %c0_i32_9 : i32
    scf.if %11 {
      %c0_10 = arith.constant 0 : index
      %c0_11 = arith.constant 0 : index
      %12 = vector.load %arg8[%c0_10, %c0_11] : memref<256x64xf32, #tpu.memory_space<vmem>>, vector<256x64xf32>
      %13 = arith.truncf %12 : vector<256x64xf32> to vector<256x64xbf16>
      %c0_12 = arith.constant 0 : index
      %c0_13 = arith.constant 0 : index
      %14 = vector.load %arg5[%c0_12, %c0_13] : memref<256x64xbf16, #tpu.memory_space<vmem>>, vector<256x64xbf16>
      tpu.vector_store %arg5[%c0_12, %c0_13], %13 {strides = array<i32>} : memref<256x64xbf16, #tpu.memory_space<vmem>>, vector<256x64xbf16>,
      %cst_14 = arith.constant dense<0.000000e+00> : vector<64xf32>
      %15 = vector.multi_reduction <add>, %12, %cst_14 [0] : vector<256x64xf32> to vector<64xf32>
      %16 = vector.shape_cast %15 : vector<64xf32> to vector<1x64xf32>
      %17 = vector.shape_cast %16 : vector<1x64xf32> to vector<1x1x64xf32>
      %c0_15 = arith.constant 0 : index
      %c0_16 = arith.constant 0 : index
      %c0_17 = arith.constant 0 : index
      %18 = vector.load %arg6[%c0_15, %c0_16, %c0_17] : memref<1x1x64xf32, #tpu.memory_space<vmem>>, vector<1x1x64xf32>
      tpu.vector_store %arg6[%c0_15, %c0_16, %c0_17], %17 {strides = array<i32>} : memref<1x1x64xf32, #tpu.memory_space<vmem>>, vector<1x1x64xf32>,
      %19 = arith.mulf %12, %12 : vector<256x64xf32>
      %cst_18 = arith.constant dense<0.000000e+00> : vector<64xf32>
      %20 = vector.multi_reduction <add>, %19, %cst_18 [0] : vector<256x64xf32> to vector<64xf32>
      %21 = vector.shape_cast %20 : vector<64xf32> to vector<1x64xf32>
      %22 = vector.shape_cast %21 : vector<1x64xf32> to vector<1x1x64xf32>
      %c0_19 = arith.constant 0 : index
      %c0_20 = arith.constant 0 : index
      %c0_21 = arith.constant 0 : index
      %23 = vector.load %arg7[%c0_19, %c0_20, %c0_21] : memref<1x1x64xf32, #tpu.memory_space<vmem>>, vector<1x1x64xf32>
      tpu.vector_store %arg7[%c0_19, %c0_20, %c0_21], %22 {strides = array<i32>} : memref<1x1x64xf32, #tpu.memory_space<vmem>>, vector<1x1x64xf32>,
    } else {
    }
    return
  }
  func.func @transform_0(%arg0: i32, %arg1: i32, %arg2: i32) -> (i32, i32) {
    %c0_i32 = arith.constant 0 : i32
    return %arg0, %arg2 : i32, i32
  }
  func.func @transform_1(%arg0: i32, %arg1: i32, %arg2: i32) -> (i32, i32) {
    %c0_i32 = arith.constant 0 : i32
    return %arg2, %arg1 : i32, i32
  }
  func.func @transform_2(%arg0: i32, %arg1: i32, %arg2: i32) -> (i32, i32) {
    %c0_i32 = arith.constant 0 : i32
    return %arg0, %arg1 : i32, i32
  }
  func.func @transform_3(%arg0: i32, %arg1: i32, %arg2: i32) -> (i32, i32, i32) {
    %c0_i32 = arith.constant 0 : i32
    %c0_i32_0 = arith.constant 0 : i32
    return %arg0, %c0_i32, %arg1 : i32, i32, i32
  }
  func.func @transform_4(%arg0: i32, %arg1: i32, %arg2: i32) -> (i32, i32, i32) {
    %c0_i32 = arith.constant 0 : i32
    %c0_i32_0 = arith.constant 0 : i32
    return %arg0, %c0_i32, %arg1 : i32, i32, i32
  }
}

</mosaic_0001>

<llo_original>
// kernel: tpu_custom_call.1
$region0: #{tpu_custom_call.1}
  #allocation0 [shape = 'u32[]', space=smem, size = 0x4, offset = 0x4, fixed_abs, tag = 'smem constant byte address 0x4 - core index']
  #allocation1 [shape = 'u32[72,128]{1,0:T(1,128)}', space=vmem, size = 0x9000, scoped, tag = 'internal scratch']
  #allocation2 [shape = 'f32[256,64]{1,0:T(8,128)}', space=vmem, size = 0x20000, scoped, tag = 'scratch operand']
  %s0 = inlined_call_operand.hbm [shape: bf16[512,256], index: 0, kind: input, shape index: {}]
  %s1 = inlined_call_operand.vmem [shape: bf16[256,64], index: 1, kind: input, shape index: {}]
  %s2 = inlined_call_operand.vmem [shape: bf16[512,64], index: 2, kind: output, shape index: {0}]
  %s3 = inlined_call_operand.hbm [shape: f32[2,1,64], index: 3, kind: output, shape index: {1}]
  %s4 = inlined_call_operand.hbm [shape: f32[2,1,64], index: 4, kind: output, shape index: {2}]
  %5 = xla_tuple %s2, %s3, %s4
  %s6 = sld [smem:[#allocation0]]
  $region69: #{tpu_custom_call.1} parent=0
    _
  %s8 = ssub.s32 1, %s6
  %s9 = scalar_select 0, %s8, %s6
  $region1: #{tpu_custom_call.1} parent=0
    #allocation3 [shape = 'u8[262144]{0}', space=vmem, size = 0x40000, scoped, tag = 'input window, operand 0']
    #allocation4 [shape = 's32[2]{0}', space=sflag, size = 0x8, scoped, tag = 'scoped memory for tpu_custom_call.1']
    #allocation5 [shape = 's32[2]{0}', space=sflag, size = 0x8, scoped, tag = 'scoped memory for tpu_custom_call.1']
    #allocation6 [shape = 'u8[1024]{0}', space=vmem, size = 0x400, scoped, tag = 'output window, operand 1']
    #allocation7 [shape = 'u8[1024]{0}', space=vmem, size = 0x400, scoped, tag = 'output window, operand 2']
    #allocation8 [shape = 's32[2]{0}', space=sflag, size = 0x8, scoped, tag = 'scoped memory for tpu_custom_call.1']
    %10 = vsyncpa [#allocation4], 0
    %s11 = scalar_lea.sflag [#allocation4], 1
    %12 = vsyncpa %s11, 0
    %13 = vsyncpa [#allocation5], 0
    %s14 = scalar_lea.sflag [#allocation5], 1
    %15 = vsyncpa %s14, 0
    %16 = vsyncpa [#allocation8], 0
    %s17 = scalar_lea.sflag [#allocation8], 1
    %18 = vsyncpa %s17, 0
    loop: start=0, step=1, limit=4
    $region2: #{tpu_custom_call.1} parent=1 // loop_pre_header
      _
    $region3: #{tpu_custom_call.1} parent=1 // loop_header
      %s20 = sphi 0, %s24
      %p21 = scmp.ge.s32.totalorder %s20, 4
      %s27 = sphi 0, %s46
      %s28 = sphi 0, %s42
      %s29 = sphi 0, %s38
      %s30 = sphi 0, %s27
      %s31 = sphi 0, %s28
      %s32 = sphi 0, %s29
      %s33 = sphi 0, %s30
      %s34 = sphi 0, %s31
      %s35 = sphi 0, %s32
      %s51 = sphi 0, %s53
      %s54 = sphi 0, %s51
      %s55 = sphi 0, %s54
      %s71 = sphi 0, %s55
      %s79 = sphi 0, %s81
      %s82 = sphi 0, %s79
      %s83 = sphi 0, %s82
      %s99 = sphi 0, %s83
      %s107 = sphi 0, %s109
      %s110 = sphi 0, %s107
      %s111 = sphi 0, %s110
      %s127 = sphi 0, %s111
      %s135 = sphi 0, %s137
      %s138 = sphi 0, %s135
      %s139 = sphi 0, %s138
      %s155 = sphi 0, %s139
      %s163 = sphi 0, %s165
      %s166 = sphi 0, %s163
      %s167 = sphi 0, %s166
      %s183 = sphi 0, %s167
    $region4: #{tpu_custom_call.1} parent=1 // loop_header_branch
      %23 = sbr.rel (%p21) target = $region8
    $region5: #{tpu_custom_call.1} parent=1 // loop_body
      %s25 = ssub.s32 %s20, 1
      %s26 = ssub.s32 %s20, 2
      %s36 = sadd.s32 1, %s29
      %p37 = scmp.ge.s32.totalorder %s36, 1
      %s38 = scalar_select %p37, 0, %s36
      %s39 = sadd.s32 1, %s28
      %s40 = scalar_select %p37, %s39, %s28
      %p41 = scmp.ge.s32.totalorder %s40, 1
      %s42 = scalar_select %p41, 0, %s40
      %s43 = sadd.s32 1, %s27
      %s44 = scalar_select %p41, %s43, %s27
      %p45 = scmp.ge.s32.totalorder %s44, 2
      %s46 = scalar_select %p45, 0, %s44
      %s47 = ssub.s32 %s27, %s46
      %s48 = ssub.s32 %s29, %s38
      %s49 = sor.u32 %s47, %s48
      %p50 = scmp.eq.s32.totalorder %s49, 0
      %s52 = sadd.s32 %s51, 1
      %s53 = scalar_select %p50, %s51, %s52
      %p56 = pneg %p50
      %p57 = scmp.eq.s32.totalorder %s20, 1
      %p58 = por %p56, %p57
      %p59 = scmp.ne.s32.totalorder %s51, %s54
      %p60 = scmp.eq.s32.totalorder %s20, 0
      %p61 = por %p59, %p60
      %p62 = scmp.ne.s32.totalorder %s51, %s54
      %p63 = scmp.eq.s32.totalorder %s25, 1
      %p64 = por %p62, %p63
      %p65 = scmp.ne.s32.totalorder %s54, %s55
      %p66 = scmp.eq.s32.totalorder %s25, 0
      %p67 = por %p65, %p66
      %p68 = scmp.ne.s32.totalorder %s54, %s55
      %p69 = scmp.eq.s32.totalorder %s26, 1
      %p70 = por %p68, %p69
      %p72 = scmp.ne.s32.totalorder %s55, %s71
      %p73 = scmp.eq.s32.totalorder %s26, 0
      %p74 = por %p72, %p73
      %s75 = ssub.s32 %s29, %s38
      %s76 = ssub.s32 %s28, %s42
      %s77 = sor.u32 %s75, %s76
      %p78 = scmp.eq.s32.totalorder %s77, 0
      %s80 = sadd.s32 %s79, 1
      %s81 = scalar_select %p78, %s79, %s80
      %p84 = pneg %p78
      %p85 = scmp.eq.s32.totalorder %s20, 1
      %p86 = por %p84, %p85
      %p87 = scmp.ne.s32.totalorder %s79, %s82
      %p88 = scmp.eq.s32.totalorder %s20, 0
      %p89 = por %p87, %p88
      %p90 = scmp.ne.s32.totalorder %s79, %s82
      %p91 = scmp.eq.s32.totalorder %s25, 1
      %p92 = por %p90, %p91
      %p93 = scmp.ne.s32.totalorder %s82, %s83
      %p94 = scmp.eq.s32.totalorder %s25, 0
      %p95 = por %p93, %p94
      %p96 = scmp.ne.s32.totalorder %s82, %s83
      %p97 = scmp.eq.s32.totalorder %s26, 1
      %p98 = por %p96, %p97
      %p100 = scmp.ne.s32.totalorder %s83, %s99
      %p101 = scmp.eq.s32.totalorder %s26, 0
      %p102 = por %p100, %p101
      %s103 = ssub.s32 %s27, %s46
      %s104 = ssub.s32 %s28, %s42
      %s105 = sor.u32 %s103, %s104
      %p106 = scmp.eq.s32.totalorder %s105, 0
      %s108 = sadd.s32 %s107, 1
      %s109 = scalar_select %p106, %s107, %s108
      %p112 = pneg %p106
      %p113 = scmp.eq.s32.totalorder %s20, 1
      %p114 = por %p112, %p113
      %p115 = scmp.ne.s32.totalorder %s107, %s110
      %p116 = scmp.eq.s32.totalorder %s20, 0
      %p117 = por %p115, %p116
      %p118 = scmp.ne.s32.totalorder %s107, %s110
      %p119 = scmp.eq.s32.totalorder %s25, 1
      %p120 = por %p118, %p119
      %p121 = scmp.ne.s32.totalorder %s110, %s111
      %p122 = scmp.eq.s32.totalorder %s25, 0
      %p123 = por %p121, %p122
      %p124 = scmp.ne.s32.totalorder %s110, %s111
      %p125 = scmp.eq.s32.totalorder %s26, 1
      %p126 = por %p124, %p125
      %p128 = scmp.ne.s32.totalorder %s111, %s127
      %p129 = scmp.eq.s32.totalorder %s26, 0
      %p130 = por %p128, %p129
      %s131 = ssub.s32 %s27, %s46
      %s132 = ssub.s32 %s28, %s42
      %s133 = sor.u32 %s131, %s132
      %p134 = scmp.eq.s32.totalorder %s133, 0
      %s136 = sadd.s32 %s135, 1
      %s137 = scalar_select %p134, %s135, %s136
      %p140 = pneg %p134
      %p141 = scmp.eq.s32.totalorder %s20, 1
      %p142 = por %p140, %p141
      %p143 = scmp.ne.s32.totalorder %s135, %s138
      %p144 = scmp.eq.s32.totalorder %s20, 0
      %p145 = por %p143, %p144
      %p146 = scmp.ne.s32.totalorder %s135, %s138
      %p147 = scmp.eq.s32.totalorder %s25, 1
      %p148 = por %p146, %p147
      %p149 = scmp.ne.s32.totalorder %s138, %s139
      %p150 = scmp.eq.s32.totalorder %s25, 0
      %p151 = por %p149, %p150
      %p152 = scmp.ne.s32.totalorder %s138, %s139
      %p153 = scmp.eq.s32.totalorder %s26, 1
      %p154 = por %p152, %p153
      %p156 = scmp.ne.s32.totalorder %s139, %s155
      %p157 = scmp.eq.s32.totalorder %s26, 0
      %p158 = por %p156, %p157
      %s159 = ssub.s32 %s27, %s46
      %s160 = ssub.s32 %s28, %s42
      %s161 = sor.u32 %s159, %s160
      %p162 = scmp.eq.s32.totalorder %s161, 0
      %s164 = sadd.s32 %s163, 1
      %s165 = scalar_select %p162, %s163, %s164
      %p168 = pneg %p162
      %p169 = scmp.eq.s32.totalorder %s20, 1
      %p170 = por %p168, %p169
      %p171 = scmp.ne.s32.totalorder %s163, %s166
      %p172 = scmp.eq.s32.totalorder %s20, 0
      %p173 = por %p171, %p172
      %p174 = scmp.ne.s32.totalorder %s163, %s166
      %p175 = scmp.eq.s32.totalorder %s25, 1
      %p176 = por %p174, %p175
      %p177 = scmp.ne.s32.totalorder %s166, %s167
      %p178 = scmp.eq.s32.totalorder %s25, 0
      %p179 = por %p177, %p178
      %p180 = scmp.ne.s32.totalorder %s166, %s167
      %p181 = scmp.eq.s32.totalorder %s26, 1
      %p182 = por %p180, %p181
      %p184 = scmp.ne.s32.totalorder %s167, %s183
      %p185 = scmp.eq.s32.totalorder %s26, 0
      %p186 = por %p184, %p185
      %p187 = scmp.le.s32.totalorder 1, %s20
      %p188 = scmp.lt.s32.totalorder %s20, 3
      %p189 = pnand %p187, %p188
      %p190 = pneg %p189
      // Predicated region
      $region9: #{tpu_custom_call.1} parent=5 // pred_check
        _
      $region10: #{tpu_custom_call.1} parent=5 // pred_check_branch
        %192 = sbr.rel (%p189) target = $region12
      $region11: #{tpu_custom_call.1} parent=5 // pred_region
        %s193 = ssub.s32 %s20, 1
        // Predicated region
        $region13: #{tpu_custom_call.1} parent=11 // pred_check
          %p194 = pneg %p95
        $region14: #{tpu_custom_call.1} parent=11 // pred_check_branch
          %196 = sbr.rel (%p194) target = $region16
        $region15: #{tpu_custom_call.1} parent=11 // pred_region
          %s197 = smul.u32 32, %s32
          %p198 = scmp.lt.s32.totalorder %s197, 31
          %s199 = scalar_select %p198, %s197, 31
          %p200 = scmp.lt.s32.totalorder %s31, 0
          %s201 = scalar_select %p200, %s31, 0
          %s202 = sadd.s32 %s201, %s199
          %s203 = smul.addr %s202, 4
          %s204 = scalar_lea.vmem %s1, %s203
          %s205 = smul.u32 32, %s32
        $region16: #{tpu_custom_call.1} parent=11 // pred_fallthru
          _
      $region12: #{tpu_custom_call.1} parent=5 // pred_fallthru
        _
      %p206 = scmp.lt.s32.totalorder %s20, 2
      // Predicated region
      $region17: #{tpu_custom_call.1} parent=5 // pred_check
        %p207 = pneg %p206
      $region18: #{tpu_custom_call.1} parent=5 // pred_check_branch
        %209 = sbr.rel (%p207) target = $region20
      $region19: #{tpu_custom_call.1} parent=5 // pred_region
        // Predicated region
        $region21: #{tpu_custom_call.1} parent=19 // pred_check
          %p210 = pneg %p61
        $region22: #{tpu_custom_call.1} parent=19 // pred_check_branch
          %212 = sbr.rel (%p210) target = $region24
        $region23: #{tpu_custom_call.1} parent=19 // pred_region
          %s213 = sand.u32 %s51, 1
          %s214 = scalar_lea.sflag [#allocation4], %s213
          %s215 = sand.u32 %s51, 1
          %s216 = smul.addr %s215, 256
          %s217 = scalar_lea.vmem [#allocation3], %s216
          %s218 = smul.u32 32, %s27
          %s219 = smul.u32 2, %s29
          %221 = vsyncadd %s214, 0
          %s222 = smul.addr %s218, 2
          %s223 = sadd.s32 %s219, %s222
          %s224 = smul.addr %s223, 4
          %s225 = scalar_lea.hbm %s0, %s224
          %s226 = sshll.u32 %s225, 4
          %s227 = int_to_ptr.hbm [resolvable:$true] %s226
          %s228 = sshll.u32 %s217, 4
          %s229 = int_to_ptr.vmem [resolvable:$true] %s228
          %234 = dma.hbm_to_vmem [thread:$0]  %s227, 4096, %s229, %s214, 128, 128, 8
        $region24: #{tpu_custom_call.1} parent=19 // pred_fallthru
          _
      $region20: #{tpu_custom_call.1} parent=5 // pred_fallthru
        _
      %p235 = scmp.le.s32.totalorder 1, %s20
      %p236 = scmp.lt.s32.totalorder %s20, 3
      %p237 = pnand %p235, %p236
      %p238 = pneg %p237
      // Predicated region
      $region25: #{tpu_custom_call.1} parent=5 // pred_check
        _
      $region26: #{tpu_custom_call.1} parent=5 // pred_check_branch
        %240 = sbr.rel (%p237) target = $region28
      $region27: #{tpu_custom_call.1} parent=5 // pred_region
        %s241 = ssub.s32 %s20, 1
        %s242 = sand.u32 %s54, 1
        %s243 = scalar_lea.sflag [#allocation4], %s242
        %s244 = sand.u32 %s54, 1
        %s245 = smul.addr %s244, 256
        %s246 = scalar_lea.vmem [#allocation3], %s245
        // Predicated region
        $region29: #{tpu_custom_call.1} parent=27 // pred_check
          %p247 = pneg %p67
        $region30: #{tpu_custom_call.1} parent=27 // pred_check_branch
          %249 = sbr.rel (%p247) target = $region32
        $region31: #{tpu_custom_call.1} parent=27 // pred_region
          %251 = dma.done %s243, 4096
        $region32: #{tpu_custom_call.1} parent=27 // pred_fallthru
          _
        %s252 = sand.u32 %s54, 1
        %s253 = scalar_lea.sflag [#allocation4], %s252
        %s254 = sand.u32 %s54, 1
        %s255 = smul.addr %s254, 256
        %s256 = scalar_lea.vmem [#allocation3], %s255
        %p257 = pneg %p67
        %p258 = pneg %p64
        %s259 = smul.u32 32, %s32
        %p260 = scmp.lt.s32.totalorder %s259, 31
        %s261 = scalar_select %p260, %s259, 31
        %p262 = scmp.lt.s32.totalorder %s31, 0
        %s263 = scalar_select %p262, %s31, 0
        %s264 = sadd.s32 %s263, %s261
        %s265 = smul.addr %s264, 4
        %s266 = scalar_lea.vmem %s1, %s265
        %p267 = pneg %p95
        %p268 = pneg %p92
        %p269 = pneg %p123
        %p270 = pneg %p120
        %s271 = smul.u32 32, %s30
        %p272 = scmp.lt.s32.totalorder %s271, 63
        %s273 = scalar_select %p272, %s271, 63
        %p274 = scmp.lt.s32.totalorder %s31, 0
        %s275 = scalar_select %p274, %s31, 0
        %s276 = sadd.s32 %s275, %s273
        %s277 = smul.addr %s276, 4
        %s278 = scalar_lea.vmem %s2, %s277
        %p279 = pneg %p151
        %p280 = pneg %p148
        %s281 = sand.u32 %s138, 1
        %s282 = scalar_lea.sflag [#allocation5], %s281
        %s283 = sand.u32 %s138, 1
        %s284 = scalar_lea.vmem [#allocation6], %s283
        %p285 = pneg %p179
        %p286 = pneg %p176
        %s287 = sand.u32 %s166, 1
        %s288 = scalar_lea.sflag [#allocation8], %s287
        %s289 = sand.u32 %s166, 1
        %s290 = scalar_lea.vmem [#allocation7], %s289
        %s291 = smul.u32 32, %s30
        %s292 = smul.u32 2, %s32
        %s293 = smul.u32 32, %s32
        %p294 = scmp.lt.s32.totalorder %s293, 31
        %s295 = scalar_select %p294, %s293, 31
        %p296 = scmp.lt.s32.totalorder %s31, 0
        %s297 = scalar_select %p296, %s31, 0
        %s298 = sadd.s32 %s297, %s295
        %s299 = smul.addr %s298, 4
        %s300 = scalar_lea.vmem %s1, %s299
        %s301 = smul.u32 32, %s32
        %s302 = smul.u32 32, %s30
        %p303 = scmp.lt.s32.totalorder %s302, 63
        %s304 = scalar_select %p303, %s302, 63
        %p305 = scmp.lt.s32.totalorder %s31, 0
        %s306 = scalar_select %p305, %s31, 0
        %s307 = sadd.s32 %s306, %s304
        %s308 = smul.addr %s307, 4
        %s309 = scalar_lea.vmem %s2, %s308
        %s310 = smul.u32 32, %s30
        %p311 = scmp.eq.s32.totalorder %s32, 0
        // Predicated region
        $region33: #{tpu_custom_call.1} parent=27 // pred_check
          %p312 = pneg %p311
        $region34: #{tpu_custom_call.1} parent=27 // pred_check_branch
          %314 = sbr.rel (%p312) target = $region36
        $region35: #{tpu_custom_call.1} parent=27 // pred_region
          %vm315 = vcmask 523264
          %316 = vst.msk [vmem:[#allocation2] sm:$0xff] %vm315, 0.0
          %317 = vst.msk [vmem:[#allocation2 + $0x8] sm:$0xff] %vm315, 0.0
          %318 = vst.msk [vmem:[#allocation2 + $0x10] sm:$0xff] %vm315, 0.0
          %319 = vst.msk [vmem:[#allocation2 + $0x18] sm:$0xff] %vm315, 0.0
          %320 = vst.msk [vmem:[#allocation2 + $0x20] sm:$0xff] %vm315, 0.0
          %321 = vst.msk [vmem:[#allocation2 + $0x28] sm:$0xff] %vm315, 0.0
          %322 = vst.msk [vmem:[#allocation2 + $0x30] sm:$0xff] %vm315, 0.0
          %323 = vst.msk [vmem:[#allocation2 + $0x38] sm:$0xff] %vm315, 0.0
          %324 = vst.msk [vmem:[#allocation2 + $0x40] sm:$0xff] %vm315, 0.0
          %325 = vst.msk [vmem:[#allocation2 + $0x48] sm:$0xff] %vm315, 0.0
          %326 = vst.msk [vmem:[#allocation2 + $0x50] sm:$0xff] %vm315, 0.0
          %327 = vst.msk [vmem:[#allocation2 + $0x58] sm:$0xff] %vm315, 0.0
          %328 = vst.msk [vmem:[#allocation2 + $0x60] sm:$0xff] %vm315, 0.0
          %329 = vst.msk [vmem:[#allocation2 + $0x68] sm:$0xff] %vm315, 0.0
          %330 = vst.msk [vmem:[#allocation2 + $0x70] sm:$0xff] %vm315, 0.0
          %331 = vst.msk [vmem:[#allocation2 + $0x78] sm:$0xff] %vm315, 0.0
          %332 = vst.msk [vmem:[#allocation2 + $0x80] sm:$0xff] %vm315, 0.0
          %333 = vst.msk [vmem:[#allocation2 + $0x88] sm:$0xff] %vm315, 0.0
          %334 = vst.msk [vmem:[#allocation2 + $0x90] sm:$0xff] %vm315, 0.0
          %335 = vst.msk [vmem:[#allocation2 + $0x98] sm:$0xff] %vm315, 0.0
          %336 = vst.msk [vmem:[#allocation2 + $0xa0] sm:$0xff] %vm315, 0.0
          %337 = vst.msk [vmem:[#allocation2 + $0xa8] sm:$0xff] %vm315, 0.0
          %338 = vst.msk [vmem:[#allocation2 + $0xb0] sm:$0xff] %vm315, 0.0
          %339 = vst.msk [vmem:[#allocation2 + $0xb8] sm:$0xff] %vm315, 0.0
          %340 = vst.msk [vmem:[#allocation2 + $0xc0] sm:$0xff] %vm315, 0.0
          %341 = vst.msk [vmem:[#allocation2 + $0xc8] sm:$0xff] %vm315, 0.0
          %342 = vst.msk [vmem:[#allocation2 + $0xd0] sm:$0xff] %vm315, 0.0
          %343 = vst.msk [vmem:[#allocation2 + $0xd8] sm:$0xff] %vm315, 0.0
          %344 = vst.msk [vmem:[#allocation2 + $0xe0] sm:$0xff] %vm315, 0.0
          %345 = vst.msk [vmem:[#allocation2 + $0xe8] sm:$0xff] %vm315, 0.0
          %346 = vst.msk [vmem:[#allocation2 + $0xf0] sm:$0xff] %vm315, 0.0
          %347 = vst.msk [vmem:[#allocation2 + $0xf8] sm:$0xff] %vm315, 0.0
        $region36: #{tpu_custom_call.1} parent=27 // pred_fallthru
          _
        %v348 = vld [vmem:[#allocation2] sm:$0xff]
        %v349 = vld [vmem:[#allocation2 + $0x8] sm:$0xff]
        %v350 = vld [vmem:[#allocation2 + $0x10] sm:$0xff]
        %v351 = vld [vmem:[#allocation2 + $0x18] sm:$0xff]
        %v352 = vld [vmem:[#allocation2 + $0x20] sm:$0xff]
        %v353 = vld [vmem:[#allocation2 + $0x28] sm:$0xff]
        %v354 = vld [vmem:[#allocation2 + $0x30] sm:$0xff]
        %v355 = vld [vmem:[#allocation2 + $0x38] sm:$0xff]
        %v356 = vld [vmem:[#allocation2 + $0x40] sm:$0xff]
        %v357 = vld [vmem:[#allocation2 + $0x48] sm:$0xff]
        %v358 = vld [vmem:[#allocation2 + $0x50] sm:$0xff]
        %v359 = vld [vmem:[#allocation2 + $0x58] sm:$0xff]
        %v360 = vld [vmem:[#allocation2 + $0x60] sm:$0xff]
        %v361 = vld [vmem:[#allocation2 + $0x68] sm:$0xff]
        %v362 = vld [vmem:[#allocation2 + $0x70] sm:$0xff]
        %v363 = vld [vmem:[#allocation2 + $0x78] sm:$0xff]
        %v364 = vld [vmem:[#allocation2 + $0x80] sm:$0xff]
        %v365 = vld [vmem:[#allocation2 + $0x88] sm:$0xff]
        %v366 = vld [vmem:[#allocation2 + $0x90] sm:$0xff]
        %v367 = vld [vmem:[#allocation2 + $0x98] sm:$0xff]
        %v368 = vld [vmem:[#allocation2 + $0xa0] sm:$0xff]
        %v369 = vld [vmem:[#allocation2 + $0xa8] sm:$0xff]
        %v370 = vld [vmem:[#allocation2 + $0xb0] sm:$0xff]
        %v371 = vld [vmem:[#allocation2 + $0xb8] sm:$0xff]
        %v372 = vld [vmem:[#allocation2 + $0xc0] sm:$0xff]
        %v373 = vld [vmem:[#allocation2 + $0xc8] sm:$0xff]
        %v374 = vld [vmem:[#allocation2 + $0xd0] sm:$0xff]
        %v375 = vld [vmem:[#allocation2 + $0xd8] sm:$0xff]
        %v376 = vld [vmem:[#allocation2 + $0xe0] sm:$0xff]
        %v377 = vld [vmem:[#allocation2 + $0xe8] sm:$0xff]
        %v378 = vld [vmem:[#allocation2 + $0xf0] sm:$0xff]
        %v379 = vld [vmem:[#allocation2 + $0xf8] sm:$0xff]
        %v380 = vld [vmem:[%s246] sm:$0xff]
        %v381 = vld [vmem:[%s246 + $0x8] sm:$0xff]
        %v382 = vld [vmem:[%s246 + $0x10] sm:$0xff]
        %v383 = vld [vmem:[%s246 + $0x18] sm:$0xff]
        %v384 = vld [vmem:[%s246 + $0x20] sm:$0xff]
        %v385 = vld [vmem:[%s246 + $0x28] sm:$0xff]
        %v386 = vld [vmem:[%s246 + $0x30] sm:$0xff]
        %v387 = vld [vmem:[%s246 + $0x38] sm:$0xff]
        %v388 = vld [vmem:[%s246 + $0x40] sm:$0xff]
        %v389 = vld [vmem:[%s246 + $0x48] sm:$0xff]
        %v390 = vld [vmem:[%s246 + $0x50] sm:$0xff]
        %v391 = vld [vmem:[%s246 + $0x58] sm:$0xff]
        %v392 = vld [vmem:[%s246 + $0x60] sm:$0xff]
        %v393 = vld [vmem:[%s246 + $0x68] sm:$0xff]
        %v394 = vld [vmem:[%s246 + $0x70] sm:$0xff]
        %v395 = vld [vmem:[%s246 + $0x78] sm:$0xff]
        %v396 = vld [vmem:[%s246 + $0x80] sm:$0xff]
        %v397 = vld [vmem:[%s246 + $0x88] sm:$0xff]
        %v398 = vld [vmem:[%s246 + $0x90] sm:$0xff]
        %v399 = vld [vmem:[%s246 + $0x98] sm:$0xff]
        %v400 = vld [vmem:[%s246 + $0xa0] sm:$0xff]
        %v401 = vld [vmem:[%s246 + $0xa8] sm:$0xff]
        %v402 = vld [vmem:[%s246 + $0xb0] sm:$0xff]
        %v403 = vld [vmem:[%s246 + $0xb8] sm:$0xff]
        %v404 = vld [vmem:[%s246 + $0xc0] sm:$0xff]
        %v405 = vld [vmem:[%s246 + $0xc8] sm:$0xff]
        %v406 = vld [vmem:[%s246 + $0xd0] sm:$0xff]
        %v407 = vld [vmem:[%s246 + $0xd8] sm:$0xff]
        %v408 = vld [vmem:[%s246 + $0xe0] sm:$0xff]
        %v409 = vld [vmem:[%s246 + $0xe8] sm:$0xff]
        %v410 = vld [vmem:[%s246 + $0xf0] sm:$0xff]
        %v411 = vld [vmem:[%s246 + $0xf8] sm:$0xff]
        %v412 = vld [vmem:[%s300] sm:$0xf]
        %v413 = vld [vmem:[%s300 + $0x4] sm:$0xf]
        %v414 = vld [vmem:[%s300 + $0x8] sm:$0xf]
        %v415 = vld [vmem:[%s300 + $0xc] sm:$0xf]
        %v416 = vld [vmem:[%s300 + $0x10] sm:$0xf]
        %v417 = vld [vmem:[%s300 + $0x14] sm:$0xf]
        %v418 = vld [vmem:[%s300 + $0x18] sm:$0xf]
        %v419 = vld [vmem:[%s300 + $0x1c] sm:$0xf]
        %v420 = vld [vmem:[%s300 + $0x20] sm:$0xf]
        %v421 = vld [vmem:[%s300 + $0x24] sm:$0xf]
        %v422 = vld [vmem:[%s300 + $0x28] sm:$0xf]
        %v423 = vld [vmem:[%s300 + $0x2c] sm:$0xf]
        %v424 = vld [vmem:[%s300 + $0x30] sm:$0xf]
        %v425 = vld [vmem:[%s300 + $0x34] sm:$0xf]
        %v426 = vld [vmem:[%s300 + $0x38] sm:$0xf]
        %v427 = vld [vmem:[%s300 + $0x3c] sm:$0xf]
        %v428 = vld [vmem:[%s300 + $0x40] sm:$0xf]
        %v429 = vld [vmem:[%s300 + $0x44] sm:$0xf]
        %v430 = vld [vmem:[%s300 + $0x48] sm:$0xf]
        %v431 = vld [vmem:[%s300 + $0x4c] sm:$0xf]
        %v432 = vld [vmem:[%s300 + $0x50] sm:$0xf]
        %v433 = vld [vmem:[%s300 + $0x54] sm:$0xf]
        %v434 = vld [vmem:[%s300 + $0x58] sm:$0xf]
        %v435 = vld [vmem:[%s300 + $0x5c] sm:$0xf]
        %v436 = vld [vmem:[%s300 + $0x60] sm:$0xf]
        %v437 = vld [vmem:[%s300 + $0x64] sm:$0xf]
        %v438 = vld [vmem:[%s300 + $0x68] sm:$0xf]
        %v439 = vld [vmem:[%s300 + $0x6c] sm:$0xf]
        %v440 = vld [vmem:[%s300 + $0x70] sm:$0xf]
        %v441 = vld [vmem:[%s300 + $0x74] sm:$0xf]
        %v442 = vld [vmem:[%s300 + $0x78] sm:$0xf]
        %v443 = vld [vmem:[%s300 + $0x7c] sm:$0xf]
        %v476 = vunpack.c.l.b16 %v380
        %v477 = vunpack.c.h.b16 %v380
        %v478 = vunpack.c.l.b16 %v381
        %v479 = vunpack.c.h.b16 %v381
        %v480 = vunpack.c.l.b16 %v382
        %v481 = vunpack.c.h.b16 %v382
        %v482 = vunpack.c.l.b16 %v383
        %v483 = vunpack.c.h.b16 %v383
        %v484 = vunpack.c.l.b16 %v384
        %v485 = vunpack.c.h.b16 %v384
        %v486 = vunpack.c.l.b16 %v385
        %v487 = vunpack.c.h.b16 %v385
        %v488 = vunpack.c.l.b16 %v386
        %v489 = vunpack.c.h.b16 %v386
        %v490 = vunpack.c.l.b16 %v387
        %v491 = vunpack.c.h.b16 %v387
        %v492 = vunpack.c.l.b16 %v388
        %v493 = vunpack.c.h.b16 %v388
        %v494 = vunpack.c.l.b16 %v389
        %v495 = vunpack.c.h.b16 %v389
        %v496 = vunpack.c.l.b16 %v390
        %v497 = vunpack.c.h.b16 %v390
        %v498 = vunpack.c.l.b16 %v391
        %v499 = vunpack.c.h.b16 %v391
        %v500 = vunpack.c.l.b16 %v392
        %v501 = vunpack.c.h.b16 %v392
        %v502 = vunpack.c.l.b16 %v393
        %v503 = vunpack.c.h.b16 %v393
        %v504 = vunpack.c.l.b16 %v394
        %v505 = vunpack.c.h.b16 %v394
        %v506 = vunpack.c.l.b16 %v395
        %v507 = vunpack.c.h.b16 %v395
        %v508 = vunpack.c.l.b16 %v396
        %v509 = vunpack.c.h.b16 %v396
        %v510 = vunpack.c.l.b16 %v397
        %v511 = vunpack.c.h.b16 %v397
        %v512 = vunpack.c.l.b16 %v398
        %v513 = vunpack.c.h.b16 %v398
        %v514 = vunpack.c.l.b16 %v399
        %v515 = vunpack.c.h.b16 %v399
        %v516 = vunpack.c.l.b16 %v400
        %v517 = vunpack.c.h.b16 %v400
        %v518 = vunpack.c.l.b16 %v401
        %v519 = vunpack.c.h.b16 %v401
        %v520 = vunpack.c.l.b16 %v402
        %v521 = vunpack.c.h.b16 %v402
        %v522 = vunpack.c.l.b16 %v403
        %v523 = vunpack.c.h.b16 %v403
        %v524 = vunpack.c.l.b16 %v404
        %v525 = vunpack.c.h.b16 %v404
        %v526 = vunpack.c.l.b16 %v405
        %v527 = vunpack.c.h.b16 %v405
        %v528 = vunpack.c.l.b16 %v406
        %v529 = vunpack.c.h.b16 %v406
        %v530 = vunpack.c.l.b16 %v407
        %v531 = vunpack.c.h.b16 %v407
        %v532 = vunpack.c.l.b16 %v408
        %v533 = vunpack.c.h.b16 %v408
        %v534 = vunpack.c.l.b16 %v409
        %v535 = vunpack.c.h.b16 %v409
        %v536 = vunpack.c.l.b16 %v410
        %v537 = vunpack.c.h.b16 %v410
        %v538 = vunpack.c.l.b16 %v411
        %v539 = vunpack.c.h.b16 %v411
        %v540 = vpack.c.b16 %v478, %v476
        %v541 = vpack.c.b16 %v479, %v477
        %v542 = vpack.c.b16 %v482, %v480
        %v543 = vpack.c.b16 %v483, %v481
        %v544 = vpack.c.b16 %v486, %v484
        %v545 = vpack.c.b16 %v487, %v485
        %v546 = vpack.c.b16 %v490, %v488
        %v547 = vpack.c.b16 %v491, %v489
        %v548 = vpack.c.b16 %v494, %v492
        %v549 = vpack.c.b16 %v495, %v493
        %v550 = vpack.c.b16 %v498, %v496
        %v551 = vpack.c.b16 %v499, %v497
        %v552 = vpack.c.b16 %v502, %v500
        %v553 = vpack.c.b16 %v503, %v501
        %v554 = vpack.c.b16 %v506, %v504
        %v555 = vpack.c.b16 %v507, %v505
        %v556 = vpack.c.b16 %v510, %v508
        %v557 = vpack.c.b16 %v511, %v509
        %v558 = vpack.c.b16 %v514, %v512
        %v559 = vpack.c.b16 %v515, %v513
        %v560 = vpack.c.b16 %v518, %v516
        %v561 = vpack.c.b16 %v519, %v517
        %v562 = vpack.c.b16 %v522, %v520
        %v563 = vpack.c.b16 %v523, %v521
        %v564 = vpack.c.b16 %v526, %v524
        %v565 = vpack.c.b16 %v527, %v525
        %v566 = vpack.c.b16 %v530, %v528
        %v567 = vpack.c.b16 %v531, %v529
        %v568 = vpack.c.b16 %v534, %v532
        %v569 = vpack.c.b16 %v535, %v533
        %v570 = vpack.c.b16 %v538, %v536
        %v571 = vpack.c.b16 %v539, %v537
        %v636 = vunpack.c.l.b16 %v412
        %v637 = vunpack.c.l.b16 %v413
        %v638 = vunpack.c.l.b16 %v414
        %v639 = vunpack.c.l.b16 %v415
        %v640 = vunpack.c.l.b16 %v416
        %v641 = vunpack.c.l.b16 %v417
        %v642 = vunpack.c.l.b16 %v418
        %v643 = vunpack.c.l.b16 %v419
        %v644 = vunpack.c.l.b16 %v420
        %v645 = vunpack.c.l.b16 %v421
        %v646 = vunpack.c.l.b16 %v422
        %v647 = vunpack.c.l.b16 %v423
        %v648 = vunpack.c.l.b16 %v424
        %v649 = vunpack.c.l.b16 %v425
        %v650 = vunpack.c.l.b16 %v426
        %v651 = vunpack.c.l.b16 %v427
        %v652 = vunpack.c.l.b16 %v428
        %v653 = vunpack.c.l.b16 %v429
        %v654 = vunpack.c.l.b16 %v430
        %v655 = vunpack.c.l.b16 %v431
        %v656 = vunpack.c.l.b16 %v432
        %v657 = vunpack.c.l.b16 %v433
        %v658 = vunpack.c.l.b16 %v434
        %v659 = vunpack.c.l.b16 %v435
        %v660 = vunpack.c.l.b16 %v436
        %v661 = vunpack.c.l.b16 %v437
        %v662 = vunpack.c.l.b16 %v438
        %v663 = vunpack.c.l.b16 %v439
        %v664 = vunpack.c.l.b16 %v440
        %v665 = vunpack.c.l.b16 %v441
        %v666 = vunpack.c.l.b16 %v442
        %v667 = vunpack.c.l.b16 %v443
        %v668 = vpack.c.b16 %v637, %v636
        %v669 = vpack.c.b16 %v639, %v638
        %v670 = vpack.c.b16 %v641, %v640
        %v671 = vpack.c.b16 %v643, %v642
        %v672 = vpack.c.b16 %v645, %v644
        %v673 = vpack.c.b16 %v647, %v646
        %v674 = vpack.c.b16 %v649, %v648
        %v675 = vpack.c.b16 %v651, %v650
        %v676 = vpack.c.b16 %v653, %v652
        %v677 = vpack.c.b16 %v655, %v654
        %v678 = vpack.c.b16 %v657, %v656
        %v679 = vpack.c.b16 %v659, %v658
        %v680 = vpack.c.b16 %v661, %v660
        %v681 = vpack.c.b16 %v663, %v662
        %v682 = vpack.c.b16 %v665, %v664
        %v683 = vpack.c.b16 %v667, %v666
        %700 = vmatpush.bf16.msra.mxu0 %v675
        %701 = vmatpush.bf16.msra.mxu0 %v674
        %702 = vmatpush.bf16.msra.mxu0 %v673
        %703 = vmatpush.bf16.msra.mxu0 %v672
        %704 = vmatpush.bf16.msra.mxu0 %v671
        %705 = vmatpush.bf16.msra.mxu0 %v670
        %706 = vmatpush.bf16.msra.mxu0 %v669
        %707 = vmatpush.bf16.msra.mxu0 %v668
        %708 = vmatmul.bf16.gmra.mxu0 %v540
        %v709 = vpop.f32.mrf.mxu0
        %v710 = vadd.f32 0.0, %v709
        %v711 = vpop.f32.mrf.mxu0
        %v712 = vadd.f32 0.0, %v711
        %713 = vmatmul.bf16.gmra.mxu0 %v542
        %v714 = vpop.f32.mrf.mxu0
        %v715 = vadd.f32 0.0, %v714
        %v716 = vpop.f32.mrf.mxu0
        %v717 = vadd.f32 0.0, %v716
        %718 = vmatmul.bf16.gmra.mxu0 %v544
        %v719 = vpop.f32.mrf.mxu0
        %v720 = vadd.f32 0.0, %v719
        %v721 = vpop.f32.mrf.mxu0
        %v722 = vadd.f32 0.0, %v721
        %723 = vmatmul.bf16.gmra.mxu0 %v546
        %v724 = vpop.f32.mrf.mxu0
        %v725 = vadd.f32 0.0, %v724
        %v726 = vpop.f32.mrf.mxu0
        %v727 = vadd.f32 0.0, %v726
        %728 = vmatmul.bf16.gmra.mxu0 %v548
        %v729 = vpop.f32.mrf.mxu0
        %v730 = vadd.f32 0.0, %v729
        %v731 = vpop.f32.mrf.mxu0
        %v732 = vadd.f32 0.0, %v731
        %733 = vmatmul.bf16.gmra.mxu0 %v550
        %v734 = vpop.f32.mrf.mxu0
        %v735 = vadd.f32 0.0, %v734
        %v736 = vpop.f32.mrf.mxu0
        %v737 = vadd.f32 0.0, %v736
        %738 = vmatmul.bf16.gmra.mxu0 %v552
        %v739 = vpop.f32.mrf.mxu0
        %v740 = vadd.f32 0.0, %v739
        %v741 = vpop.f32.mrf.mxu0
        %v742 = vadd.f32 0.0, %v741
        %743 = vmatmul.bf16.gmra.mxu0 %v554
        %v744 = vpop.f32.mrf.mxu0
        %v745 = vadd.f32 0.0, %v744
        %v746 = vpop.f32.mrf.mxu0
        %v747 = vadd.f32 0.0, %v746
        %748 = vmatmul.bf16.gmra.mxu0 %v556
        %v749 = vpop.f32.mrf.mxu0
        %v750 = vadd.f32 0.0, %v749
        %v751 = vpop.f32.mrf.mxu0
        %v752 = vadd.f32 0.0, %v751
        %753 = vmatmul.bf16.gmra.mxu0 %v558
        %v754 = vpop.f32.mrf.mxu0
        %v755 = vadd.f32 0.0, %v754
        %v756 = vpop.f32.mrf.mxu0
        %v757 = vadd.f32 0.0, %v756
        %758 = vmatmul.bf16.gmra.mxu0 %v560
        %v759 = vpop.f32.mrf.mxu0
        %v760 = vadd.f32 0.0, %v759
        %v761 = vpop.f32.mrf.mxu0
        %v762 = vadd.f32 0.0, %v761
        %763 = vmatmul.bf16.gmra.mxu0 %v562
        %v764 = vpop.f32.mrf.mxu0
        %v765 = vadd.f32 0.0, %v764
        %v766 = vpop.f32.mrf.mxu0
        %v767 = vadd.f32 0.0, %v766
        %768 = vmatmul.bf16.gmra.mxu0 %v564
        %v769 = vpop.f32.mrf.mxu0
        %v770 = vadd.f32 0.0, %v769
        %v771 = vpop.f32.mrf.mxu0
        %v772 = vadd.f32 0.0, %v771
        %773 = vmatmul.bf16.gmra.mxu0 %v566
        %v774 = vpop.f32.mrf.mxu0
        %v775 = vadd.f32 0.0, %v774
        %v776 = vpop.f32.mrf.mxu0
        %v777 = vadd.f32 0.0, %v776
        %778 = vmatmul.bf16.gmra.mxu0 %v568
        %v779 = vpop.f32.mrf.mxu0
        %v780 = vadd.f32 0.0, %v779
        %v781 = vpop.f32.mrf.mxu0
        %v782 = vadd.f32 0.0, %v781
        %783 = vmatmul.bf16.gmra.mxu0 %v570
        %v784 = vpop.f32.mrf.mxu0
        %v785 = vadd.f32 0.0, %v784
        %v786 = vpop.f32.mrf.mxu0
        %v787 = vadd.f32 0.0, %v786
        %788 = vdwg.mxu0
        %789 = vmatpush.bf16.msra.mxu0 %v683
        %790 = vmatpush.bf16.msra.mxu0 %v682
        %791 = vmatpush.bf16.msra.mxu0 %v681
        %792 = vmatpush.bf16.msra.mxu0 %v680
        %793 = vmatpush.bf16.msra.mxu0 %v679
        %794 = vmatpush.bf16.msra.mxu0 %v678
        %795 = vmatpush.bf16.msra.mxu0 %v677
        %796 = vmatpush.bf16.msra.mxu0 %v676
        %797 = vmatmul.bf16.gmra.mxu0 %v541
        %v798 = vpop.f32.mrf.mxu0
        %v799 = vadd.f32 %v710, %v798
        %v800 = vpop.f32.mrf.mxu0
        %v801 = vadd.f32 %v712, %v800
        %802 = vmatmul.bf16.gmra.mxu0 %v543
        %v803 = vpop.f32.mrf.mxu0
        %v804 = vadd.f32 %v715, %v803
        %v805 = vpop.f32.mrf.mxu0
        %v806 = vadd.f32 %v717, %v805
        %807 = vmatmul.bf16.gmra.mxu0 %v545
        %v808 = vpop.f32.mrf.mxu0
        %v809 = vadd.f32 %v720, %v808
        %v810 = vpop.f32.mrf.mxu0
        %v811 = vadd.f32 %v722, %v810
        %812 = vmatmul.bf16.gmra.mxu0 %v547
        %v813 = vpop.f32.mrf.mxu0
        %v814 = vadd.f32 %v725, %v813
        %v815 = vpop.f32.mrf.mxu0
        %v816 = vadd.f32 %v727, %v815
        %817 = vmatmul.bf16.gmra.mxu0 %v549
        %v818 = vpop.f32.mrf.mxu0
        %v819 = vadd.f32 %v730, %v818
        %v820 = vpop.f32.mrf.mxu0
        %v821 = vadd.f32 %v732, %v820
        %822 = vmatmul.bf16.gmra.mxu0 %v551
        %v823 = vpop.f32.mrf.mxu0
        %v824 = vadd.f32 %v735, %v823
        %v825 = vpop.f32.mrf.mxu0
        %v826 = vadd.f32 %v737, %v825
        %827 = vmatmul.bf16.gmra.mxu0 %v553
        %v828 = vpop.f32.mrf.mxu0
        %v829 = vadd.f32 %v740, %v828
        %v830 = vpop.f32.mrf.mxu0
        %v831 = vadd.f32 %v742, %v830
        %832 = vmatmul.bf16.gmra.mxu0 %v555
        %v833 = vpop.f32.mrf.mxu0
        %v834 = vadd.f32 %v745, %v833
        %v835 = vpop.f32.mrf.mxu0
        %v836 = vadd.f32 %v747, %v835
        %837 = vmatmul.bf16.gmra.mxu0 %v557
        %v838 = vpop.f32.mrf.mxu0
        %v839 = vadd.f32 %v750, %v838
        %v840 = vpop.f32.mrf.mxu0
        %v841 = vadd.f32 %v752, %v840
        %842 = vmatmul.bf16.gmra.mxu0 %v559
        %v843 = vpop.f32.mrf.mxu0
        %v844 = vadd.f32 %v755, %v843
        %v845 = vpop.f32.mrf.mxu0
        %v846 = vadd.f32 %v757, %v845
        %847 = vmatmul.bf16.gmra.mxu0 %v561
        %v848 = vpop.f32.mrf.mxu0
        %v849 = vadd.f32 %v760, %v848
        %v850 = vpop.f32.mrf.mxu0
        %v851 = vadd.f32 %v762, %v850
        %852 = vmatmul.bf16.gmra.mxu0 %v563
        %v853 = vpop.f32.mrf.mxu0
        %v854 = vadd.f32 %v765, %v853
        %v855 = vpop.f32.mrf.mxu0
        %v856 = vadd.f32 %v767, %v855
        %857 = vmatmul.bf16.gmra.mxu0 %v565
        %v858 = vpop.f32.mrf.mxu0
        %v859 = vadd.f32 %v770, %v858
        %v860 = vpop.f32.mrf.mxu0
        %v861 = vadd.f32 %v772, %v860
        %862 = vmatmul.bf16.gmra.mxu0 %v567
        %v863 = vpop.f32.mrf.mxu0
        %v864 = vadd.f32 %v775, %v863
        %v865 = vpop.f32.mrf.mxu0
        %v866 = vadd.f32 %v777, %v865
        %867 = vmatmul.bf16.gmra.mxu0 %v569
        %v868 = vpop.f32.mrf.mxu0
        %v869 = vadd.f32 %v780, %v868
        %v870 = vpop.f32.mrf.mxu0
        %v871 = vadd.f32 %v782, %v870
        %872 = vmatmul.bf16.gmra.mxu0 %v571
        %v873 = vpop.f32.mrf.mxu0
        %v874 = vadd.f32 %v785, %v873
        %v875 = vpop.f32.mrf.mxu0
        %v876 = vadd.f32 %v787, %v875
        %877 = vdwg.mxu0
        %v878 = vadd.f32 %v348, %v799
        %v879 = vadd.f32 %v349, %v801
        %v880 = vadd.f32 %v350, %v804
        %v881 = vadd.f32 %v351, %v806
        %v882 = vadd.f32 %v352, %v809
        %v883 = vadd.f32 %v353, %v811
        %v884 = vadd.f32 %v354, %v814
        %v885 = vadd.f32 %v355, %v816
        %v886 = vadd.f32 %v356, %v819
        %v887 = vadd.f32 %v357, %v821
        %v888 = vadd.f32 %v358, %v824
        %v889 = vadd.f32 %v359, %v826
        %v890 = vadd.f32 %v360, %v829
        %v891 = vadd.f32 %v361, %v831
        %v892 = vadd.f32 %v362, %v834
        %v893 = vadd.f32 %v363, %v836
        %v894 = vadd.f32 %v364, %v839
        %v895 = vadd.f32 %v365, %v841
        %v896 = vadd.f32 %v366, %v844
        %v897 = vadd.f32 %v367, %v846
        %v898 = vadd.f32 %v368, %v849
        %v899 = vadd.f32 %v369, %v851
        %v900 = vadd.f32 %v370, %v854
        %v901 = vadd.f32 %v371, %v856
        %v902 = vadd.f32 %v372, %v859
        %v903 = vadd.f32 %v373, %v861
        %v904 = vadd.f32 %v374, %v864
        %v905 = vadd.f32 %v375, %v866
        %v906 = vadd.f32 %v376, %v869
        %v907 = vadd.f32 %v377, %v871
        %v908 = vadd.f32 %v378, %v874
        %v909 = vadd.f32 %v379, %v876
        %vm910 = vcmask 523264
        %911 = vst.msk [vmem:[#allocation2] sm:$0xff] %vm910, %v878
        %912 = vst.msk [vmem:[#allocation2 + $0x8] sm:$0xff] %vm910, %v879
        %913 = vst.msk [vmem:[#allocation2 + $0x10] sm:$0xff] %vm910, %v880
        %914 = vst.msk [vmem:[#allocation2 + $0x18] sm:$0xff] %vm910, %v881
        %915 = vst.msk [vmem:[#allocation2 + $0x20] sm:$0xff] %vm910, %v882
        %916 = vst.msk [vmem:[#allocation2 + $0x28] sm:$0xff] %vm910, %v883
        %917 = vst.msk [vmem:[#allocation2 + $0x30] sm:$0xff] %vm910, %v884
        %918 = vst.msk [vmem:[#allocation2 + $0x38] sm:$0xff] %vm910, %v885
        %919 = vst.msk [vmem:[#allocation2 + $0x40] sm:$0xff] %vm910, %v886
        %920 = vst.msk [vmem:[#allocation2 + $0x48] sm:$0xff] %vm910, %v887
        %921 = vst.msk [vmem:[#allocation2 + $0x50] sm:$0xff] %vm910, %v888
        %922 = vst.msk [vmem:[#allocation2 + $0x58] sm:$0xff] %vm910, %v889
        %923 = vst.msk [vmem:[#allocation2 + $0x60] sm:$0xff] %vm910, %v890
        %924 = vst.msk [vmem:[#allocation2 + $0x68] sm:$0xff] %vm910, %v891
        %925 = vst.msk [vmem:[#allocation2 + $0x70] sm:$0xff] %vm910, %v892
        %926 = vst.msk [vmem:[#allocation2 + $0x78] sm:$0xff] %vm910, %v893
        %927 = vst.msk [vmem:[#allocation2 + $0x80] sm:$0xff] %vm910, %v894
        %928 = vst.msk [vmem:[#allocation2 + $0x88] sm:$0xff] %vm910, %v895
        %929 = vst.msk [vmem:[#allocation2 + $0x90] sm:$0xff] %vm910, %v896
        %930 = vst.msk [vmem:[#allocation2 + $0x98] sm:$0xff] %vm910, %v897
        %931 = vst.msk [vmem:[#allocation2 + $0xa0] sm:$0xff] %vm910, %v898
        %932 = vst.msk [vmem:[#allocation2 + $0xa8] sm:$0xff] %vm910, %v899
        %933 = vst.msk [vmem:[#allocation2 + $0xb0] sm:$0xff] %vm910, %v900
        %934 = vst.msk [vmem:[#allocation2 + $0xb8] sm:$0xff] %vm910, %v901
        %935 = vst.msk [vmem:[#allocation2 + $0xc0] sm:$0xff] %vm910, %v902
        %936 = vst.msk [vmem:[#allocation2 + $0xc8] sm:$0xff] %vm910, %v903
        %937 = vst.msk [vmem:[#allocation2 + $0xd0] sm:$0xff] %vm910, %v904
        %938 = vst.msk [vmem:[#allocation2 + $0xd8] sm:$0xff] %vm910, %v905
        %939 = vst.msk [vmem:[#allocation2 + $0xe0] sm:$0xff] %vm910, %v906
        %940 = vst.msk [vmem:[#allocation2 + $0xe8] sm:$0xff] %vm910, %v907
        %941 = vst.msk [vmem:[#allocation2 + $0xf0] sm:$0xff] %vm910, %v908
        %942 = vst.msk [vmem:[#allocation2 + $0xf8] sm:$0xff] %vm910, %v909
        // Predicated region
        $region37: #{tpu_custom_call.1} parent=27 // pred_check
          %p943 = pneg %p311
        $region38: #{tpu_custom_call.1} parent=27 // pred_check_branch
          %945 = sbr.rel (%p943) target = $region40
        $region39: #{tpu_custom_call.1} parent=27 // pred_region
          %v946 = vld [vmem:[#allocation2] sm:$0xff]
          %v947 = vld [vmem:[#allocation2 + $0x8] sm:$0xff]
          %v948 = vld [vmem:[#allocation2 + $0x10] sm:$0xff]
          %v949 = vld [vmem:[#allocation2 + $0x18] sm:$0xff]
          %v950 = vld [vmem:[#allocation2 + $0x20] sm:$0xff]
          %v951 = vld [vmem:[#allocation2 + $0x28] sm:$0xff]
          %v952 = vld [vmem:[#allocation2 + $0x30] sm:$0xff]
          %v953 = vld [vmem:[#allocation2 + $0x38] sm:$0xff]
          %v954 = vld [vmem:[#allocation2 + $0x40] sm:$0xff]
          %v955 = vld [vmem:[#allocation2 + $0x48] sm:$0xff]
          %v956 = vld [vmem:[#allocation2 + $0x50] sm:$0xff]
          %v957 = vld [vmem:[#allocation2 + $0x58] sm:$0xff]
          %v958 = vld [vmem:[#allocation2 + $0x60] sm:$0xff]
          %v959 = vld [vmem:[#allocation2 + $0x68] sm:$0xff]
          %v960 = vld [vmem:[#allocation2 + $0x70] sm:$0xff]
          %v961 = vld [vmem:[#allocation2 + $0x78] sm:$0xff]
          %v962 = vld [vmem:[#allocation2 + $0x80] sm:$0xff]
          %v963 = vld [vmem:[#allocation2 + $0x88] sm:$0xff]
          %v964 = vld [vmem:[#allocation2 + $0x90] sm:$0xff]
          %v965 = vld [vmem:[#allocation2 + $0x98] sm:$0xff]
          %v966 = vld [vmem:[#allocation2 + $0xa0] sm:$0xff]
          %v967 = vld [vmem:[#allocation2 + $0xa8] sm:$0xff]
          %v968 = vld [vmem:[#allocation2 + $0xb0] sm:$0xff]
          %v969 = vld [vmem:[#allocation2 + $0xb8] sm:$0xff]
          %v970 = vld [vmem:[#allocation2 + $0xc0] sm:$0xff]
          %v971 = vld [vmem:[#allocation2 + $0xc8] sm:$0xff]
          %v972 = vld [vmem:[#allocation2 + $0xd0] sm:$0xff]
          %v973 = vld [vmem:[#allocation2 + $0xd8] sm:$0xff]
          %v974 = vld [vmem:[#allocation2 + $0xe0] sm:$0xff]
          %v975 = vld [vmem:[#allocation2 + $0xe8] sm:$0xff]
          %v976 = vld [vmem:[#allocation2 + $0xf0] sm:$0xff]
          %v977 = vld [vmem:[#allocation2 + $0xf8] sm:$0xff]
          %v978 = vpack.c.bf16 %v946, %v946
          %v979 = vpack.c.bf16 %v947, %v947
          %v980 = vpack.c.bf16 %v948, %v948
          %v981 = vpack.c.bf16 %v949, %v949
          %v982 = vpack.c.bf16 %v950, %v950
          %v983 = vpack.c.bf16 %v951, %v951
          %v984 = vpack.c.bf16 %v952, %v952
          %v985 = vpack.c.bf16 %v953, %v953
          %v986 = vpack.c.bf16 %v954, %v954
          %v987 = vpack.c.bf16 %v955, %v955
          %v988 = vpack.c.bf16 %v956, %v956
          %v989 = vpack.c.bf16 %v957, %v957
          %v990 = vpack.c.bf16 %v958, %v958
          %v991 = vpack.c.bf16 %v959, %v959
          %v992 = vpack.c.bf16 %v960, %v960
          %v993 = vpack.c.bf16 %v961, %v961
          %v994 = vpack.c.bf16 %v962, %v962
          %v995 = vpack.c.bf16 %v963, %v963
          %v996 = vpack.c.bf16 %v964, %v964
          %v997 = vpack.c.bf16 %v965, %v965
          %v998 = vpack.c.bf16 %v966, %v966
          %v999 = vpack.c.bf16 %v967, %v967
          %v1000 = vpack.c.bf16 %v968, %v968
          %v1001 = vpack.c.bf16 %v969, %v969
          %v1002 = vpack.c.bf16 %v970, %v970
          %v1003 = vpack.c.bf16 %v971, %v971
          %v1004 = vpack.c.bf16 %v972, %v972
          %v1005 = vpack.c.bf16 %v973, %v973
          %v1006 = vpack.c.bf16 %v974, %v974
          %v1007 = vpack.c.bf16 %v975, %v975
          %v1008 = vpack.c.bf16 %v976, %v976
          %v1009 = vpack.c.bf16 %v977, %v977
          %vm1010 = vcmask 519168
          %1011 = vst.msk [vmem:[%s309] sm:$0xf] %vm1010, %v978
          %1012 = vst.msk [vmem:[%s309 + $0x4] sm:$0xf] %vm1010, %v979
          %1013 = vst.msk [vmem:[%s309 + $0x8] sm:$0xf] %vm1010, %v980
          %1014 = vst.msk [vmem:[%s309 + $0xc] sm:$0xf] %vm1010, %v981
          %1015 = vst.msk [vmem:[%s309 + $0x10] sm:$0xf] %vm1010, %v982
          %1016 = vst.msk [vmem:[%s309 + $0x14] sm:$0xf] %vm1010, %v983
          %1017 = vst.msk [vmem:[%s309 + $0x18] sm:$0xf] %vm1010, %v984
          %1018 = vst.msk [vmem:[%s309 + $0x1c] sm:$0xf] %vm1010, %v985
          %1019 = vst.msk [vmem:[%s309 + $0x20] sm:$0xf] %vm1010, %v986
          %1020 = vst.msk [vmem:[%s309 + $0x24] sm:$0xf] %vm1010, %v987
          %1021 = vst.msk [vmem:[%s309 + $0x28] sm:$0xf] %vm1010, %v988
          %1022 = vst.msk [vmem:[%s309 + $0x2c] sm:$0xf] %vm1010, %v989
          %1023 = vst.msk [vmem:[%s309 + $0x30] sm:$0xf] %vm1010, %v990
          %1024 = vst.msk [vmem:[%s309 + $0x34] sm:$0xf] %vm1010, %v991
          %1025 = vst.msk [vmem:[%s309 + $0x38] sm:$0xf] %vm1010, %v992
          %1026 = vst.msk [vmem:[%s309 + $0x3c] sm:$0xf] %vm1010, %v993
          %1027 = vst.msk [vmem:[%s309 + $0x40] sm:$0xf] %vm1010, %v994
          %1028 = vst.msk [vmem:[%s309 + $0x44] sm:$0xf] %vm1010, %v995
          %1029 = vst.msk [vmem:[%s309 + $0x48] sm:$0xf] %vm1010, %v996
          %1030 = vst.msk [vmem:[%s309 + $0x4c] sm:$0xf] %vm1010, %v997
          %1031 = vst.msk [vmem:[%s309 + $0x50] sm:$0xf] %vm1010, %v998
          %1032 = vst.msk [vmem:[%s309 + $0x54] sm:$0xf] %vm1010, %v999
          %1033 = vst.msk [vmem:[%s309 + $0x58] sm:$0xf] %vm1010, %v1000
          %1034 = vst.msk [vmem:[%s309 + $0x5c] sm:$0xf] %vm1010, %v1001
          %1035 = vst.msk [vmem:[%s309 + $0x60] sm:$0xf] %vm1010, %v1002
          %1036 = vst.msk [vmem:[%s309 + $0x64] sm:$0xf] %vm1010, %v1003
          %1037 = vst.msk [vmem:[%s309 + $0x68] sm:$0xf] %vm1010, %v1004
          %1038 = vst.msk [vmem:[%s309 + $0x6c] sm:$0xf] %vm1010, %v1005
          %1039 = vst.msk [vmem:[%s309 + $0x70] sm:$0xf] %vm1010, %v1006
          %1040 = vst.msk [vmem:[%s309 + $0x74] sm:$0xf] %vm1010, %v1007
          %1041 = vst.msk [vmem:[%s309 + $0x78] sm:$0xf] %vm1010, %v1008
          %1042 = vst.msk [vmem:[%s309 + $0x7c] sm:$0xf] %vm1010, %v1009
          %v1043 = vsel %vm910, %v946, 0.0
          %v1044 = vsel %vm910, %v947, 0.0
          %v1045 = vadd.f32 %v1043, %v1044
          %v1046 = vsel %vm910, %v948, 0.0
          %v1047 = vadd.f32 %v1045, %v1046
          %v1048 = vsel %vm910, %v949, 0.0
          %v1049 = vadd.f32 %v1047, %v1048
          %v1050 = vsel %vm910, %v950, 0.0
          %v1051 = vadd.f32 %v1049, %v1050
          %v1052 = vsel %vm910, %v951, 0.0
          %v1053 = vadd.f32 %v1051, %v1052
          %v1054 = vsel %vm910, %v952, 0.0
          %v1055 = vadd.f32 %v1053, %v1054
          %v1056 = vsel %vm910, %v953, 0.0
          %v1057 = vadd.f32 %v1055, %v1056
          %v1058 = vsel %vm910, %v954, 0.0
          %v1059 = vadd.f32 %v1057, %v1058
          %v1060 = vsel %vm910, %v955, 0.0
          %v1061 = vadd.f32 %v1059, %v1060
          %v1062 = vsel %vm910, %v956, 0.0
          %v1063 = vadd.f32 %v1061, %v1062
          %v1064 = vsel %vm910, %v957, 0.0
          %v1065 = vadd.f32 %v1063, %v1064
          %v1066 = vsel %vm910, %v958, 0.0
          %v1067 = vadd.f32 %v1065, %v1066
          %v1068 = vsel %vm910, %v959, 0.0
          %v1069 = vadd.f32 %v1067, %v1068
          %v1070 = vsel %vm910, %v960, 0.0
          %v1071 = vadd.f32 %v1069, %v1070
          %v1072 = vsel %vm910, %v961, 0.0
          %v1073 = vadd.f32 %v1071, %v1072
          %v1074 = vsel %vm910, %v962, 0.0
          %v1075 = vadd.f32 %v1073, %v1074
          %v1076 = vsel %vm910, %v963, 0.0
          %v1077 = vadd.f32 %v1075, %v1076
          %v1078 = vsel %vm910, %v964, 0.0
          %v1079 = vadd.f32 %v1077, %v1078
          %v1080 = vsel %vm910, %v965, 0.0
          %v1081 = vadd.f32 %v1079, %v1080
          %v1082 = vsel %vm910, %v966, 0.0
          %v1083 = vadd.f32 %v1081, %v1082
          %v1084 = vsel %vm910, %v967, 0.0
          %v1085 = vadd.f32 %v1083, %v1084
          %v1086 = vsel %vm910, %v968, 0.0
          %v1087 = vadd.f32 %v1085, %v1086
          %v1088 = vsel %vm910, %v969, 0.0
          %v1089 = vadd.f32 %v1087, %v1088
          %v1090 = vsel %vm910, %v970, 0.0
          %v1091 = vadd.f32 %v1089, %v1090
          %v1092 = vsel %vm910, %v971, 0.0
          %v1093 = vadd.f32 %v1091, %v1092
          %v1094 = vsel %vm910, %v972, 0.0
          %v1095 = vadd.f32 %v1093, %v1094
          %v1096 = vsel %vm910, %v973, 0.0
          %v1097 = vadd.f32 %v1095, %v1096
          %v1098 = vsel %vm910, %v974, 0.0
          %v1099 = vadd.f32 %v1097, %v1098
          %v1100 = vsel %vm910, %v975, 0.0
          %v1101 = vadd.f32 %v1099, %v1100
          %v1102 = vsel %vm910, %v976, 0.0
          %v1103 = vadd.f32 %v1101, %v1102
          %v1104 = vsel %vm910, %v977, 0.0
          %v1105 = vadd.f32 %v1103, %v1104
          %v1106 = vrot.slane %v1105, 4
          %v1107 = vadd.f32 %v1105, %v1106
          %v1108 = vrot.slane %v1107, 2
          %v1109 = vadd.f32 %v1107, %v1108
          %v1110 = vrot.slane %v1109, 1
          %v1111 = vadd.f32 %v1109, %v1110
          %vm1112 = vcmask 516096
          %1113 = vst.msk [vmem:[%s284] sm:$0x1] %vm1112, %v1111
          %v1114 = vmul.f32 %v946, %v946
          %v1115 = vmul.f32 %v947, %v947
          %v1116 = vmul.f32 %v948, %v948
          %v1117 = vmul.f32 %v949, %v949
          %v1118 = vmul.f32 %v950, %v950
          %v1119 = vmul.f32 %v951, %v951
          %v1120 = vmul.f32 %v952, %v952
          %v1121 = vmul.f32 %v953, %v953
          %v1122 = vmul.f32 %v954, %v954
          %v1123 = vmul.f32 %v955, %v955
          %v1124 = vmul.f32 %v956, %v956
          %v1125 = vmul.f32 %v957, %v957
          %v1126 = vmul.f32 %v958, %v958
          %v1127 = vmul.f32 %v959, %v959
          %v1128 = vmul.f32 %v960, %v960
          %v1129 = vmul.f32 %v961, %v961
          %v1130 = vmul.f32 %v962, %v962
          %v1131 = vmul.f32 %v963, %v963
          %v1132 = vmul.f32 %v964, %v964
          %v1133 = vmul.f32 %v965, %v965
          %v1134 = vmul.f32 %v966, %v966
          %v1135 = vmul.f32 %v967, %v967
          %v1136 = vmul.f32 %v968, %v968
          %v1137 = vmul.f32 %v969, %v969
          %v1138 = vmul.f32 %v970, %v970
          %v1139 = vmul.f32 %v971, %v971
          %v1140 = vmul.f32 %v972, %v972
          %v1141 = vmul.f32 %v973, %v973
          %v1142 = vmul.f32 %v974, %v974
          %v1143 = vmul.f32 %v975, %v975
          %v1144 = vmul.f32 %v976, %v976
          %v1145 = vmul.f32 %v977, %v977
          %v1146 = vsel %vm910, %v1114, 0.0
          %v1147 = vsel %vm910, %v1115, 0.0
          %v1148 = vadd.f32 %v1146, %v1147
          %v1149 = vsel %vm910, %v1116, 0.0
          %v1150 = vadd.f32 %v1148, %v1149
          %v1151 = vsel %vm910, %v1117, 0.0
          %v1152 = vadd.f32 %v1150, %v1151
          %v1153 = vsel %vm910, %v1118, 0.0
          %v1154 = vadd.f32 %v1152, %v1153
          %v1155 = vsel %vm910, %v1119, 0.0
          %v1156 = vadd.f32 %v1154, %v1155
          %v1157 = vsel %vm910, %v1120, 0.0
          %v1158 = vadd.f32 %v1156, %v1157
          %v1159 = vsel %vm910, %v1121, 0.0
          %v1160 = vadd.f32 %v1158, %v1159
          %v1161 = vsel %vm910, %v1122, 0.0
          %v1162 = vadd.f32 %v1160, %v1161
          %v1163 = vsel %vm910, %v1123, 0.0
          %v1164 = vadd.f32 %v1162, %v1163
          %v1165 = vsel %vm910, %v1124, 0.0
          %v1166 = vadd.f32 %v1164, %v1165
          %v1167 = vsel %vm910, %v1125, 0.0
          %v1168 = vadd.f32 %v1166, %v1167
          %v1169 = vsel %vm910, %v1126, 0.0
          %v1170 = vadd.f32 %v1168, %v1169
          %v1171 = vsel %vm910, %v1127, 0.0
          %v1172 = vadd.f32 %v1170, %v1171
          %v1173 = vsel %vm910, %v1128, 0.0
          %v1174 = vadd.f32 %v1172, %v1173
          %v1175 = vsel %vm910, %v1129, 0.0
          %v1176 = vadd.f32 %v1174, %v1175
          %v1177 = vsel %vm910, %v1130, 0.0
          %v1178 = vadd.f32 %v1176, %v1177
          %v1179 = vsel %vm910, %v1131, 0.0
          %v1180 = vadd.f32 %v1178, %v1179
          %v1181 = vsel %vm910, %v1132, 0.0
          %v1182 = vadd.f32 %v1180, %v1181
          %v1183 = vsel %vm910, %v1133, 0.0
          %v1184 = vadd.f32 %v1182, %v1183
          %v1185 = vsel %vm910, %v1134, 0.0
          %v1186 = vadd.f32 %v1184, %v1185
          %v1187 = vsel %vm910, %v1135, 0.0
          %v1188 = vadd.f32 %v1186, %v1187
          %v1189 = vsel %vm910, %v1136, 0.0
          %v1190 = vadd.f32 %v1188, %v1189
          %v1191 = vsel %vm910, %v1137, 0.0
          %v1192 = vadd.f32 %v1190, %v1191
          %v1193 = vsel %vm910, %v1138, 0.0
          %v1194 = vadd.f32 %v1192, %v1193
          %v1195 = vsel %vm910, %v1139, 0.0
          %v1196 = vadd.f32 %v1194, %v1195
          %v1197 = vsel %vm910, %v1140, 0.0
          %v1198 = vadd.f32 %v1196, %v1197
          %v1199 = vsel %vm910, %v1141, 0.0
          %v1200 = vadd.f32 %v1198, %v1199
          %v1201 = vsel %vm910, %v1142, 0.0
          %v1202 = vadd.f32 %v1200, %v1201
          %v1203 = vsel %vm910, %v1143, 0.0
          %v1204 = vadd.f32 %v1202, %v1203
          %v1205 = vsel %vm910, %v1144, 0.0
          %v1206 = vadd.f32 %v1204, %v1205
          %v1207 = vsel %vm910, %v1145, 0.0
          %v1208 = vadd.f32 %v1206, %v1207
          %v1209 = vrot.slane %v1208, 4
          %v1210 = vadd.f32 %v1208, %v1209
          %v1211 = vrot.slane %v1210, 2
          %v1212 = vadd.f32 %v1210, %v1211
          %v1213 = vrot.slane %v1212, 1
          %v1214 = vadd.f32 %v1212, %v1213
          %1215 = vst.msk [vmem:[%s290] sm:$0x1] %vm1112, %v1214
        $region40: #{tpu_custom_call.1} parent=27 // pred_fallthru
          _
        %s1216 = smul.u32 32, %s30
        %p1217 = scmp.lt.s32.totalorder %s1216, 63
        %s1218 = scalar_select %p1217, %s1216, 63
        %p1219 = scmp.lt.s32.totalorder %s31, 0
        %s1220 = scalar_select %p1219, %s31, 0
        %s1221 = sadd.s32 %s1220, %s1218
        %s1222 = smul.addr %s1221, 4
        %s1223 = scalar_lea.vmem %s2, %s1222
        %s1224 = sand.u32 %s138, 1
        %s1225 = scalar_lea.sflag [#allocation5], %s1224
        %s1226 = sand.u32 %s138, 1
        %s1227 = scalar_lea.vmem [#allocation6], %s1226
        %s1228 = sand.u32 %s166, 1
        %s1229 = scalar_lea.sflag [#allocation8], %s1228
        %s1230 = sand.u32 %s166, 1
        %s1231 = scalar_lea.vmem [#allocation7], %s1230
        // Predicated region
        $region41: #{tpu_custom_call.1} parent=27 // pred_check
          %p1232 = pneg %p120
        $region42: #{tpu_custom_call.1} parent=27 // pred_check_branch
          %1234 = sbr.rel (%p1232) target = $region44
        $region43: #{tpu_custom_call.1} parent=27 // pred_region
          %s1235 = smul.u32 32, %s30
        $region44: #{tpu_custom_call.1} parent=27 // pred_fallthru
          _
        // Predicated region
        $region45: #{tpu_custom_call.1} parent=27 // pred_check
          %p1236 = pneg %p148
        $region46: #{tpu_custom_call.1} parent=27 // pred_check_branch
          %1238 = sbr.rel (%p1236) target = $region48
        $region47: #{tpu_custom_call.1} parent=27 // pred_region
          %1240 = vsyncadd %s1225, 0
          %s1241 = sadd.s32 %s31, %s30
          %s1242 = scalar_lea.hbm %s3, %s1241
          %s1244 = sshll.u32 %s1227, 4
          %s1245 = int_to_ptr.vmem [resolvable:$true] %s1244
          %s1246 = sshll.u32 %s1242, 4
          %s1247 = int_to_ptr.hbm [resolvable:$true] %s1246
          %1249 = dma.vmem_to_hbm [thread:$0]  %s1245, 16, %s1247, %s1225
        $region48: #{tpu_custom_call.1} parent=27 // pred_fallthru
          _
        // Predicated region
        $region49: #{tpu_custom_call.1} parent=27 // pred_check
          %p1250 = pneg %p176
        $region50: #{tpu_custom_call.1} parent=27 // pred_check_branch
          %1252 = sbr.rel (%p1250) target = $region52
        $region51: #{tpu_custom_call.1} parent=27 // pred_region
          %1254 = vsyncadd %s1229, 0
          %s1255 = sadd.s32 %s31, %s30
          %s1256 = scalar_lea.hbm %s4, %s1255
          %s1258 = sshll.u32 %s1231, 4
          %s1259 = int_to_ptr.vmem [resolvable:$true] %s1258
          %s1260 = sshll.u32 %s1256, 4
          %s1261 = int_to_ptr.hbm [resolvable:$true] %s1260
          %1263 = dma.vmem_to_hbm [thread:$0]  %s1259, 16, %s1261, %s1229
        $region52: #{tpu_custom_call.1} parent=27 // pred_fallthru
          _
      $region28: #{tpu_custom_call.1} parent=5 // pred_fallthru
        _
      %p1264 = scmp.le.s32.totalorder 2, %s20
      // Predicated region
      $region53: #{tpu_custom_call.1} parent=5 // pred_check
        %p1265 = pneg %p1264
      $region54: #{tpu_custom_call.1} parent=5 // pred_check_branch
        %1267 = sbr.rel (%p1265) target = $region56
      $region55: #{tpu_custom_call.1} parent=5 // pred_region
        %s1268 = ssub.s32 %s20, 2
        // Predicated region
        $region57: #{tpu_custom_call.1} parent=55 // pred_check
          %p1269 = pneg %p126
        $region58: #{tpu_custom_call.1} parent=55 // pred_check_branch
          %1271 = sbr.rel (%p1269) target = $region60
        $region59: #{tpu_custom_call.1} parent=55 // pred_region
          %s1272 = smul.u32 32, %s33
          %p1273 = scmp.lt.s32.totalorder %s1272, 63
          %s1274 = scalar_select %p1273, %s1272, 63
          %p1275 = scmp.lt.s32.totalorder %s34, 0
          %s1276 = scalar_select %p1275, %s34, 0
          %s1277 = sadd.s32 %s1276, %s1274
          %s1278 = smul.addr %s1277, 4
          %s1279 = scalar_lea.vmem %s2, %s1278
        $region60: #{tpu_custom_call.1} parent=55 // pred_fallthru
          _
        // Predicated region
        $region61: #{tpu_custom_call.1} parent=55 // pred_check
          %p1280 = pneg %p154
        $region62: #{tpu_custom_call.1} parent=55 // pred_check_branch
          %1282 = sbr.rel (%p1280) target = $region64
        $region63: #{tpu_custom_call.1} parent=55 // pred_region
          %s1283 = sand.u32 %s139, 1
          %s1284 = scalar_lea.sflag [#allocation5], %s1283
          %s1285 = sand.u32 %s139, 1
          %s1286 = scalar_lea.vmem [#allocation6], %s1285
          %1288 = dma.done %s1284, 16
        $region64: #{tpu_custom_call.1} parent=55 // pred_fallthru
          _
        // Predicated region
        $region65: #{tpu_custom_call.1} parent=55 // pred_check
          %p1289 = pneg %p182
        $region66: #{tpu_custom_call.1} parent=55 // pred_check_branch
          %1291 = sbr.rel (%p1289) target = $region68
        $region67: #{tpu_custom_call.1} parent=55 // pred_region
          %s1292 = sand.u32 %s167, 1
          %s1293 = scalar_lea.sflag [#allocation8], %s1292
          %s1294 = sand.u32 %s167, 1
          %s1295 = scalar_lea.vmem [#allocation7], %s1294
          %1297 = dma.done %s1293, 16
        $region68: #{tpu_custom_call.1} parent=55 // pred_fallthru
          _
      $region56: #{tpu_custom_call.1} parent=5 // pred_fallthru
        _
    $region6: #{tpu_custom_call.1} parent=1 // loop_footer
      %s24 = sadd.s32 1, %s20
    $region7: #{tpu_custom_call.1} parent=1 // loop_footer_branch
      %19 = sbr.rel target = $region3
    $region8: #{tpu_custom_call.1} parent=1 // loop_exit
      _
    %1298 = vsyncpa [#allocation4], 1
    %s1299 = scalar_lea.sflag [#allocation4], 1
    %1300 = vsyncpa %s1299, 1
    %1301 = vsyncpa [#allocation5], 1
    %s1302 = scalar_lea.sflag [#allocation5], 1
    %1303 = vsyncpa %s1302, 1
    %1304 = vsyncpa [#allocation8], 1
    %s1305 = scalar_lea.sflag [#allocation8], 1
    %1306 = vsyncpa %s1305, 1

</llo_original>
